<compile_context>
chip_gen: v6e
topology: v6e:2x2x1
jax: 0.10.0
libtpu: 0.0.40
codegen_flags: <defaults>
</compile_context>

<pallas_src>
import functools

import jax
import jax.numpy as jnp
from jax.experimental import pallas as pl
from jax.experimental.pallas import tpu as pltpu

NEG_SLOPE = 0.2   # DGL GATConv default LeakyReLU negative slope
SEM_HIDDEN = 128  # SemanticAttention default hidden_size


# ---------------------------------------------------------------------------
# Fully fused HAN kernel: all layers (M GAT convs + semantic attention each)
# plus the final prediction Linear, in a single invocation.
# ---------------------------------------------------------------------------
def _han_kernel(layer_cfg, num_meta_paths, *refs):
    M = num_meta_paths
    feats_ref, adjs_ref = refs[0], refs[1]
    pos = 2
    layer_refs = []
    for _ in layer_cfg:
        layer_refs.append(refs[pos:pos + 6])
        pos += 6
    pw_ref, pb_ref, o_ref = refs[pos], refs[pos + 1], refs[pos + 2]

    N = feats_ref.shape[0]
    h = feats_ref[...]                                           # (N, Fin)

    # Additive mask bias: 0 on edges, -1e30 on non-edges.  Built once per
    # meta-path and reused by every head of every layer.
    neg_bias = [(adjs_ref[mp] - 1.0) * 1e30 for mp in range(M)]  # (N, N) each

    for (H, Fo), (w_ref, a_ref, b_ref, sw1_ref, sb1_ref, sw2_ref) in zip(
            layer_cfg, layer_refs):
        D = H * Fo

        # ---- projection: ONE matmul for all meta-paths & heads -------------
        feat_all = jnp.dot(h, w_ref[...],
                           preferred_element_type=jnp.float32)   # (N, M*D)

        # ---- attention logits el/er for every (meta-path, head): ONE dot ---
        # column 2*(mp*H+hd)   -> el (src term), column +1 -> er (dst term)
        el_er = jnp.dot(feat_all, a_ref[...],
                        preferred_element_type=jnp.float32)      # (N, M*2H)
        el_er_t = jnp.transpose(el_er)                           # (M*2H, N)

        # ---- per meta-path GAT (heads stay lane-folded) ---------------------
        z = []                                                   # z[mp]: (N, D)
        for mp in range(M):
            feat_mp = feat_all[:, mp * D:(mp + 1) * D]           # (N, D)
            nb = neg_bias[mp]
            rst_heads = []
            for hd in range(H):
                c = mp * 2 * H + 2 * hd
                el_t = el_er_t[c:c + 1, :]                       # (1, N) src
                er = el_er[:, c + 1:c + 2]                       # (N, 1) dst
                # e[dst, src] = LeakyReLU(er[dst] + el[src]) + mask_bias
                e = er + el_t                                    # (N, N)
                e = jnp.maximum(e, NEG_SLOPE * e)
                e = e + nb
                m = jnp.max(e, axis=-1, keepdims=True)
                p = jnp.exp(e - m)                               # 0 on non-edges
                inv_den = pl.reciprocal(
                    jnp.sum(p, axis=-1, keepdims=True), approx=True)
                alpha = p * inv_den                              # edge softmax
                rst_heads.append(
                    jnp.dot(alpha, feat_mp[:, hd * Fo:(hd + 1) * Fo],
                            preferred_element_type=jnp.float32))  # (N, Fo)
            rst = jnp.concatenate(rst_heads, axis=-1) + b_ref[mp]  # (N, D)
            # ELU on the full head-folded slab
            z.append(jnp.where(rst > 0, rst,
                               jnp.exp(jnp.minimum(rst, 0.0)) - 1.0))

        # ---- semantic attention across meta-paths (single dot chain) --------
        zcat = jnp.concatenate(z, axis=0)                        # (M*N, D)
        proj = jnp.tanh(jnp.dot(zcat, sw1_ref[...],
                                preferred_element_type=jnp.float32)
                        + sb1_ref[...])                          # (M*N, Hs)
        s = jnp.dot(proj, sw2_ref[...],
                    preferred_element_type=jnp.float32)          # (M*N, 1)

        inv_n = 1.0 / float(N)
        scores = [jnp.sum(s[mp * N:(mp + 1) * N], keepdims=True) * inv_n
                  for mp in range(M)]                            # (1, 1) each
        wmax = scores[0]
        for mp in range(1, M):
            wmax = jnp.maximum(wmax, scores[mp])
        exps = [jnp.exp(sc - wmax) for sc in scores]
        tot = exps[0]
        for mp in range(1, M):
            tot = tot + exps[mp]
        betas = [ex / tot for ex in exps]                        # exact divide

        # ---- meta-path mix: one beta-weighted add over (N, D) ---------------
        h = betas[0] * z[0]
        for mp in range(1, M):
            h = h + betas[mp] * z[mp]

    # ---- fused prediction Linear: one lane-dense (N, D) @ (D, C) dot --------
    o_ref[...] = jnp.dot(h, pw_ref[...],
                         preferred_element_type=jnp.float32) + pb_ref[...]


# ---------------------------------------------------------------------------
# Wrapper: single pallas_call for the whole network
# ---------------------------------------------------------------------------
def han_forward(params, adjs, feats):
    M, N, _ = adjs.shape
    C = params["pred_W"].shape[1]
    layer_cfg = tuple((l["num_heads"], l["head_dim"]) for l in params["layers"])

    inputs = [feats, adjs]
    for l in params["layers"]:
        inputs += [l["W"], l["A"], l["bias"], l["sem_W1"], l["sem_b1"], l["sem_w2"]]
    inputs += [params["pred_W"], params["pred_b"]]

    # Explicit VMEM budget sized from the actual buffers (generous headroom
    # for in-kernel temporaries), instead of relying on the scoped default.
    io_bytes = sum(int(x.size) * x.dtype.itemsize for x in inputs) + N * C * 4
    vmem_limit = min(max(8 * io_bytes + (2 << 20), 4 << 20), 64 << 20)

    vmem_spec = pl.BlockSpec(memory_space=pltpu.MemorySpace.VMEM)
    kernel = functools.partial(_han_kernel, layer_cfg, M)
    return pl.pallas_call(
        kernel,
        out_shape=jax.ShapeDtypeStruct((N, C), jnp.float32),
        in_specs=[vmem_spec] * len(inputs),
        out_specs=vmem_spec,
        compiler_params=pltpu.CompilerParams(vmem_limit_bytes=int(vmem_limit)),
    )(*inputs)


# ---------------------------------------------------------------------------
# Parameter init (deterministic, synthetic) — meta-paths & heads lane-folded
# ---------------------------------------------------------------------------
def init_han_params(key, opt):
    def nrm(k, shape, scale=0.1):
        return (scale * jax.random.normal(k, shape)).astype(jnp.float32)

    params = {"layers": []}
    in_size = opt["in_features"]
    M = opt["num_meta_paths"]
    Fo = opt["tea_hid"]
    for H in opt["num_heads"]:
        D = H * Fo
        Ws, als, ars, bs = [], [], [], []
        for _ in range(M):
            key, k1, k2, k3, k4 = jax.random.split(key, 5)
            W = nrm(k1, (H, in_size, Fo))                        # per-head weights
            # fold heads into lanes: (Fin, H*Fo), column hd*Fo+f = W[hd, :, f]
            Ws.append(jnp.transpose(W, (1, 0, 2)).reshape(in_size, D))
            als.append(nrm(k2, (H, Fo)))
            ars.append(nrm(k3, (H, Fo)))
            bs.append(nrm(k4, (H, Fo)).reshape(1, D))
        W_all = jnp.concatenate(Ws, axis=1)                      # (Fin, M*D)

        # Block-diagonal el/er selector so one matmul yields every head's
        # attention logits: column 2*(mp*H+hd) = attn_l restricted to head hd
        # of meta-path mp, column +1 = attn_r likewise.
        A = jnp.zeros((M * D, M * 2 * H), dtype=jnp.float32)
        for mp in range(M):
            for hd in range(H):
                r0 = mp * D + hd * Fo
                A = A.at[r0:r0 + Fo, mp * 2 * H + 2 * hd].set(als[mp][hd])
                A = A.at[r0:r0 + Fo, mp * 2 * H + 2 * hd + 1].set(ars[mp][hd])

        key, k1, k2, k3 = jax.random.split(key, 4)
        params["layers"].append({
            "num_heads": H,
            "head_dim": Fo,
            "W": W_all,                    # (Fin, M*H*Fo)
            "A": A,                        # (M*H*Fo, M*2H)
            "bias": jnp.stack(bs, 0),      # (M, 1, H*Fo)
            "sem_W1": nrm(k1, (D, SEM_HIDDEN)),
            "sem_b1": nrm(k2, (1, SEM_HIDDEN)),
            "sem_w2": nrm(k3, (SEM_HIDDEN, 1)),
        })
        in_size = D

    key, k1, k2 = jax.random.split(key, 3)
    params["pred_W"] = nrm(k1, (opt["tea_hid"] * opt["num_heads"][-1],
                                opt["num_class"]))
    params["pred_b"] = nrm(k2, (1, opt["num_class"]))
    return params


# ---------------------------------------------------------------------------
# Main
# ---------------------------------------------------------------------------
if __name__ == "__main__":
    opt = {
        "num_meta_paths": 2,
        "in_features": 16,
        "tea_hid": 8,
        "num_heads": [2, 2],
        "tea_drop": 0.0,
        "num_class": 4,
    }
    N = 16  # number of graph nodes

    key = jax.random.PRNGKey(0)
    key, kp, kf, kg = jax.random.split(key, 4)

    params = init_han_params(kp, opt)

    # node features (N, in_features)
    feats = jax.random.normal(kf, (N, opt["in_features"]), dtype=jnp.float32)

    # meta-path graphs: dense adjacency adj[dst, src] in {0,1}, with self-loops
    gkeys = jax.random.split(kg, opt["num_meta_paths"])
    eye = jnp.eye(N, dtype=jnp.float32)
    adjs = []
    for gk in gkeys:
        adj = jax.random.bernoulli(gk, 0.3, (N, N)).astype(jnp.float32)
        adjs.append(jnp.maximum(adj, eye))   # every dst has at least one neighbor
    adjs = jnp.stack(adjs, 0)                # (M, N, N)

    logits = han_forward(params, adjs, feats)
    logits = jax.block_until_ready(logits)
    assert logits.shape == (N, opt["num_class"])
    assert bool(jnp.all(jnp.isfinite(logits)))
    print("KERNEL_OK")
</pallas_src>

<mosaic_0001>
module attributes {stable_mosaic.version = 11 : i64} {
  func.func @_han_kernel(%arg0: memref<16x16xf32, #tpu.memory_space<vmem>>, %arg1: memref<2x16x16xf32, #tpu.memory_space<vmem>>, %arg2: memref<16x32xf32, #tpu.memory_space<vmem>>, %arg3: memref<32x8xf32, #tpu.memory_space<vmem>>, %arg4: memref<2x1x16xf32, #tpu.memory_space<vmem>>, %arg5: memref<16x128xf32, #tpu.memory_space<vmem>>, %arg6: memref<1x128xf32, #tpu.memory_space<vmem>>, %arg7: memref<128x1xf32, #tpu.memory_space<vmem>>, %arg8: memref<16x32xf32, #tpu.memory_space<vmem>>, %arg9: memref<32x8xf32, #tpu.memory_space<vmem>>, %arg10: memref<2x1x16xf32, #tpu.memory_space<vmem>>, %arg11: memref<16x128xf32, #tpu.memory_space<vmem>>, %arg12: memref<1x128xf32, #tpu.memory_space<vmem>>, %arg13: memref<128x1xf32, #tpu.memory_space<vmem>>, %arg14: memref<16x4xf32, #tpu.memory_space<vmem>>, %arg15: memref<1x4xf32, #tpu.memory_space<vmem>>, %arg16: memref<16x4xf32, #tpu.memory_space<vmem>>) attributes {dimension_semantics = [], scalar_prefetch = 0 : i64, scratch_operands = 0 : i64, tpu.core_type = #tpu.core_type<tc>} {
    %c0 = arith.constant 0 : index
    %c0_0 = arith.constant 0 : index
    %0 = vector.load %arg0[%c0, %c0_0] : memref<16x16xf32, #tpu.memory_space<vmem>>, vector<16x16xf32>
    %c0_1 = arith.constant 0 : index
    %c0_2 = arith.constant 0 : index
    %c0_3 = arith.constant 0 : index
    %1 = vector.load %arg1[%c0_1, %c0_2, %c0_3] : memref<2x16x16xf32, #tpu.memory_space<vmem>>, vector<1x16x16xf32>
    %2 = vector.shape_cast %1 : vector<1x16x16xf32> to vector<16x16xf32>
    %cst = arith.constant 1.000000e+00 : f32
    %3 = vector.broadcast %cst : f32 to vector<16x16xf32>
    %4 = arith.subf %2, %3 : vector<16x16xf32>
    %cst_4 = arith.constant 1.000000e+30 : f32
    %5 = vector.broadcast %cst_4 : f32 to vector<16x16xf32>
    %6 = arith.mulf %4, %5 : vector<16x16xf32>
    %c1 = arith.constant 1 : index
    %c0_5 = arith.constant 0 : index
    %c0_6 = arith.constant 0 : index
    %7 = vector.load %arg1[%c1, %c0_5, %c0_6] : memref<2x16x16xf32, #tpu.memory_space<vmem>>, vector<1x16x16xf32>
    %8 = vector.shape_cast %7 : vector<1x16x16xf32> to vector<16x16xf32>
    %cst_7 = arith.constant 1.000000e+00 : f32
    %9 = vector.broadcast %cst_7 : f32 to vector<16x16xf32>
    %10 = arith.subf %8, %9 : vector<16x16xf32>
    %cst_8 = arith.constant 1.000000e+30 : f32
    %11 = vector.broadcast %cst_8 : f32 to vector<16x16xf32>
    %12 = arith.mulf %10, %11 : vector<16x16xf32>
    %c0_9 = arith.constant 0 : index
    %c0_10 = arith.constant 0 : index
    %13 = vector.load %arg2[%c0_9, %c0_10] : memref<16x32xf32, #tpu.memory_space<vmem>>, vector<16x32xf32>
    %cst_11 = arith.constant dense<0.000000e+00> : vector<16x32xf32>
    %14 = tpu.matmul %0, %13, %cst_11 {dimension_numbers = #tpu.dot_dimension_numbers<[1], [0], [0], [1], [0, 0, 1, 1], [], []>} : vector<16x16xf32>, vector<16x32xf32>, vector<16x32xf32> -> vector<16x32xf32>
    %c0_12 = arith.constant 0 : index
    %c0_13 = arith.constant 0 : index
    %15 = vector.load %arg3[%c0_12, %c0_13] : memref<32x8xf32, #tpu.memory_space<vmem>>, vector<32x8xf32>
    %cst_14 = arith.constant dense<0.000000e+00> : vector<16x8xf32>
    %16 = tpu.matmul %14, %15, %cst_14 {dimension_numbers = #tpu.dot_dimension_numbers<[1], [0], [0], [1], [0, 0, 1, 1], [], []>} : vector<16x32xf32>, vector<32x8xf32>, vector<16x8xf32> -> vector<16x8xf32>
    %17 = tpu.transpose %16, [1, 0] : vector<16x8xf32> -> vector<8x16xf32>
    %18 = vector.extract_strided_slice %14 {offsets = [0, 0], sizes = [16, 16], strides = [1, 1]} : vector<16x32xf32> to vector<16x16xf32>
    %19 = vector.extract_strided_slice %17 {offsets = [0, 0], sizes = [1, 16], strides = [1, 1]} : vector<8x16xf32> to vector<1x16xf32>
    %20 = vector.extract_strided_slice %16 {offsets = [0, 1], sizes = [16, 1], strides = [1, 1]} : vector<16x8xf32> to vector<16x1xf32>
    %21 = vector.broadcast %20 : vector<16x1xf32> to vector<16x16xf32>
    %22 = vector.broadcast %19 : vector<1x16xf32> to vector<16x16xf32>
    %23 = arith.addf %21, %22 : vector<16x16xf32>
    %cst_15 = arith.constant 2.000000e-01 : f32
    %24 = vector.broadcast %cst_15 : f32 to vector<16x16xf32>
    %25 = arith.mulf %24, %23 : vector<16x16xf32>
    %26 = arith.maximumf %23, %25 : vector<16x16xf32>
    %27 = arith.addf %26, %6 : vector<16x16xf32>
    %cst_16 = arith.constant dense<0xFF800000> : vector<16xf32>
    %28 = vector.multi_reduction <maximumf>, %27, %cst_16 [1] : vector<16x16xf32> to vector<16xf32>
    %29 = vector.shape_cast %28 : vector<16xf32> to vector<16x1xf32>
    %30 = vector.broadcast %29 : vector<16x1xf32> to vector<16x16xf32>
    %31 = arith.subf %27, %30 : vector<16x16xf32>
    %32 = math.exp %31 : vector<16x16xf32>
    %cst_17 = arith.constant dense<0.000000e+00> : vector<16xf32>
    %33 = vector.multi_reduction <add>, %32, %cst_17 [1] : vector<16x16xf32> to vector<16xf32>
    %34 = vector.shape_cast %33 : vector<16xf32> to vector<16x1xf32>
    %35 = tpu.reciprocal %34 {approx = true} : vector<16x1xf32> -> vector<16x1xf32>
    %36 = vector.broadcast %35 : vector<16x1xf32> to vector<16x16xf32>
    %37 = arith.mulf %32, %36 : vector<16x16xf32>
    %38 = vector.extract_strided_slice %18 {offsets = [0, 0], sizes = [16, 8], strides = [1, 1]} : vector<16x16xf32> to vector<16x8xf32>
    %cst_18 = arith.constant dense<0.000000e+00> : vector<16x8xf32>
    %39 = tpu.matmul %37, %38, %cst_18 {dimension_numbers = #tpu.dot_dimension_numbers<[1], [0], [0], [1], [0, 0, 1, 1], [], []>} : vector<16x16xf32>, vector<16x8xf32>, vector<16x8xf32> -> vector<16x8xf32>
    %40 = vector.extract_strided_slice %17 {offsets = [2, 0], sizes = [1, 16], strides = [1, 1]} : vector<8x16xf32> to vector<1x16xf32>
    %41 = vector.extract_strided_slice %16 {offsets = [0, 3], sizes = [16, 1], strides = [1, 1]} : vector<16x8xf32> to vector<16x1xf32>
    %42 = vector.broadcast %41 : vector<16x1xf32> to vector<16x16xf32>
    %43 = vector.broadcast %40 : vector<1x16xf32> to vector<16x16xf32>
    %44 = arith.addf %42, %43 : vector<16x16xf32>
    %cst_19 = arith.constant 2.000000e-01 : f32
    %45 = vector.broadcast %cst_19 : f32 to vector<16x16xf32>
    %46 = arith.mulf %45, %44 : vector<16x16xf32>
    %47 = arith.maximumf %44, %46 : vector<16x16xf32>
    %48 = arith.addf %47, %6 : vector<16x16xf32>
    %cst_20 = arith.constant dense<0xFF800000> : vector<16xf32>
    %49 = vector.multi_reduction <maximumf>, %48, %cst_20 [1] : vector<16x16xf32> to vector<16xf32>
    %50 = vector.shape_cast %49 : vector<16xf32> to vector<16x1xf32>
    %51 = vector.broadcast %50 : vector<16x1xf32> to vector<16x16xf32>
    %52 = arith.subf %48, %51 : vector<16x16xf32>
    %53 = math.exp %52 : vector<16x16xf32>
    %cst_21 = arith.constant dense<0.000000e+00> : vector<16xf32>
    %54 = vector.multi_reduction <add>, %53, %cst_21 [1] : vector<16x16xf32> to vector<16xf32>
    %55 = vector.shape_cast %54 : vector<16xf32> to vector<16x1xf32>
    %56 = tpu.reciprocal %55 {approx = true} : vector<16x1xf32> -> vector<16x1xf32>
    %57 = vector.broadcast %56 : vector<16x1xf32> to vector<16x16xf32>
    %58 = arith.mulf %53, %57 : vector<16x16xf32>
    %59 = vector.extract_strided_slice %18 {offsets = [0, 8], sizes = [16, 8], strides = [1, 1]} : vector<16x16xf32> to vector<16x8xf32>
    %cst_22 = arith.constant dense<0.000000e+00> : vector<16x8xf32>
    %60 = tpu.matmul %58, %59, %cst_22 {dimension_numbers = #tpu.dot_dimension_numbers<[1], [0], [0], [1], [0, 0, 1, 1], [], []>} : vector<16x16xf32>, vector<16x8xf32>, vector<16x8xf32> -> vector<16x8xf32>
    %61 = tpu.concatenate %39, %60 in 1 : vector<16x8xf32>, vector<16x8xf32> -> vector<16x16xf32>
    %c0_23 = arith.constant 0 : index
    %c0_24 = arith.constant 0 : index
    %c0_25 = arith.constant 0 : index
    %62 = vector.load %arg4[%c0_23, %c0_24, %c0_25] : memref<2x1x16xf32, #tpu.memory_space<vmem>>, vector<1x1x16xf32>
    %63 = vector.shape_cast %62 : vector<1x1x16xf32> to vector<1x16xf32>
    %64 = vector.broadcast %63 : vector<1x16xf32> to vector<16x16xf32>
    %65 = arith.addf %61, %64 : vector<16x16xf32>
    %cst_26 = arith.constant 0.000000e+00 : f32
    %66 = vector.broadcast %cst_26 : f32 to vector<16x16xf32>
    %67 = arith.cmpf ogt, %65, %66 : vector<16x16xf32>
    %cst_27 = arith.constant 0.000000e+00 : f32
    %68 = vector.broadcast %cst_27 : f32 to vector<16x16xf32>
    %69 = arith.minimumf %65, %68 : vector<16x16xf32>
    %70 = math.exp %69 : vector<16x16xf32>
    %cst_28 = arith.constant 1.000000e+00 : f32
    %71 = vector.broadcast %cst_28 : f32 to vector<16x16xf32>
    %72 = arith.subf %70, %71 : vector<16x16xf32>
    %73 = arith.select %67, %65, %72 : vector<16x16xi1>, vector<16x16xf32>
    %74 = vector.extract_strided_slice %14 {offsets = [0, 16], sizes = [16, 16], strides = [1, 1]} : vector<16x32xf32> to vector<16x16xf32>
    %75 = vector.extract_strided_slice %17 {offsets = [4, 0], sizes = [1, 16], strides = [1, 1]} : vector<8x16xf32> to vector<1x16xf32>
    %76 = vector.extract_strided_slice %16 {offsets = [0, 5], sizes = [16, 1], strides = [1, 1]} : vector<16x8xf32> to vector<16x1xf32>
    %77 = vector.broadcast %76 : vector<16x1xf32> to vector<16x16xf32>
    %78 = vector.broadcast %75 : vector<1x16xf32> to vector<16x16xf32>
    %79 = arith.addf %77, %78 : vector<16x16xf32>
    %cst_29 = arith.constant 2.000000e-01 : f32
    %80 = vector.broadcast %cst_29 : f32 to vector<16x16xf32>
    %81 = arith.mulf %80, %79 : vector<16x16xf32>
    %82 = arith.maximumf %79, %81 : vector<16x16xf32>
    %83 = arith.addf %82, %12 : vector<16x16xf32>
    %cst_30 = arith.constant dense<0xFF800000> : vector<16xf32>
    %84 = vector.multi_reduction <maximumf>, %83, %cst_30 [1] : vector<16x16xf32> to vector<16xf32>
    %85 = vector.shape_cast %84 : vector<16xf32> to vector<16x1xf32>
    %86 = vector.broadcast %85 : vector<16x1xf32> to vector<16x16xf32>
    %87 = arith.subf %83, %86 : vector<16x16xf32>
    %88 = math.exp %87 : vector<16x16xf32>
    %cst_31 = arith.constant dense<0.000000e+00> : vector<16xf32>
    %89 = vector.multi_reduction <add>, %88, %cst_31 [1] : vector<16x16xf32> to vector<16xf32>
    %90 = vector.shape_cast %89 : vector<16xf32> to vector<16x1xf32>
    %91 = tpu.reciprocal %90 {approx = true} : vector<16x1xf32> -> vector<16x1xf32>
    %92 = vector.broadcast %91 : vector<16x1xf32> to vector<16x16xf32>
    %93 = arith.mulf %88, %92 : vector<16x16xf32>
    %94 = vector.extract_strided_slice %74 {offsets = [0, 0], sizes = [16, 8], strides = [1, 1]} : vector<16x16xf32> to vector<16x8xf32>
    %cst_32 = arith.constant dense<0.000000e+00> : vector<16x8xf32>
    %95 = tpu.matmul %93, %94, %cst_32 {dimension_numbers = #tpu.dot_dimension_numbers<[1], [0], [0], [1], [0, 0, 1, 1], [], []>} : vector<16x16xf32>, vector<16x8xf32>, vector<16x8xf32> -> vector<16x8xf32>
    %96 = vector.extract_strided_slice %17 {offsets = [6, 0], sizes = [1, 16], strides = [1, 1]} : vector<8x16xf32> to vector<1x16xf32>
    %97 = vector.extract_strided_slice %16 {offsets = [0, 7], sizes = [16, 1], strides = [1, 1]} : vector<16x8xf32> to vector<16x1xf32>
    %98 = vector.broadcast %97 : vector<16x1xf32> to vector<16x16xf32>
    %99 = vector.broadcast %96 : vector<1x16xf32> to vector<16x16xf32>
    %100 = arith.addf %98, %99 : vector<16x16xf32>
    %cst_33 = arith.constant 2.000000e-01 : f32
    %101 = vector.broadcast %cst_33 : f32 to vector<16x16xf32>
    %102 = arith.mulf %101, %100 : vector<16x16xf32>
    %103 = arith.maximumf %100, %102 : vector<16x16xf32>
    %104 = arith.addf %103, %12 : vector<16x16xf32>
    %cst_34 = arith.constant dense<0xFF800000> : vector<16xf32>
    %105 = vector.multi_reduction <maximumf>, %104, %cst_34 [1] : vector<16x16xf32> to vector<16xf32>
    %106 = vector.shape_cast %105 : vector<16xf32> to vector<16x1xf32>
    %107 = vector.broadcast %106 : vector<16x1xf32> to vector<16x16xf32>
    %108 = arith.subf %104, %107 : vector<16x16xf32>
    %109 = math.exp %108 : vector<16x16xf32>
    %cst_35 = arith.constant dense<0.000000e+00> : vector<16xf32>
    %110 = vector.multi_reduction <add>, %109, %cst_35 [1] : vector<16x16xf32> to vector<16xf32>
    %111 = vector.shape_cast %110 : vector<16xf32> to vector<16x1xf32>
    %112 = tpu.reciprocal %111 {approx = true} : vector<16x1xf32> -> vector<16x1xf32>
    %113 = vector.broadcast %112 : vector<16x1xf32> to vector<16x16xf32>
    %114 = arith.mulf %109, %113 : vector<16x16xf32>
    %115 = vector.extract_strided_slice %74 {offsets = [0, 8], sizes = [16, 8], strides = [1, 1]} : vector<16x16xf32> to vector<16x8xf32>
    %cst_36 = arith.constant dense<0.000000e+00> : vector<16x8xf32>
    %116 = tpu.matmul %114, %115, %cst_36 {dimension_numbers = #tpu.dot_dimension_numbers<[1], [0], [0], [1], [0, 0, 1, 1], [], []>} : vector<16x16xf32>, vector<16x8xf32>, vector<16x8xf32> -> vector<16x8xf32>
    %117 = tpu.concatenate %95, %116 in 1 : vector<16x8xf32>, vector<16x8xf32> -> vector<16x16xf32>
    %c1_37 = arith.constant 1 : index
    %c0_38 = arith.constant 0 : index
    %c0_39 = arith.constant 0 : index
    %118 = vector.load %arg4[%c1_37, %c0_38, %c0_39] : memref<2x1x16xf32, #tpu.memory_space<vmem>>, vector<1x1x16xf32>
    %119 = vector.shape_cast %118 : vector<1x1x16xf32> to vector<1x16xf32>
    %120 = vector.broadcast %119 : vector<1x16xf32> to vector<16x16xf32>
    %121 = arith.addf %117, %120 : vector<16x16xf32>
    %cst_40 = arith.constant 0.000000e+00 : f32
    %122 = vector.broadcast %cst_40 : f32 to vector<16x16xf32>
    %123 = arith.cmpf ogt, %121, %122 : vector<16x16xf32>
    %cst_41 = arith.constant 0.000000e+00 : f32
    %124 = vector.broadcast %cst_41 : f32 to vector<16x16xf32>
    %125 = arith.minimumf %121, %124 : vector<16x16xf32>
    %126 = math.exp %125 : vector<16x16xf32>
    %cst_42 = arith.constant 1.000000e+00 : f32
    %127 = vector.broadcast %cst_42 : f32 to vector<16x16xf32>
    %128 = arith.subf %126, %127 : vector<16x16xf32>
    %129 = arith.select %123, %121, %128 : vector<16x16xi1>, vector<16x16xf32>
    %130 = tpu.concatenate %73, %129 in 0 : vector<16x16xf32>, vector<16x16xf32> -> vector<32x16xf32>
    %c0_43 = arith.constant 0 : index
    %c0_44 = arith.constant 0 : index
    %131 = vector.load %arg5[%c0_43, %c0_44] : memref<16x128xf32, #tpu.memory_space<vmem>>, vector<16x128xf32>
    %cst_45 = arith.constant dense<0.000000e+00> : vector<32x128xf32>
    %132 = tpu.matmul %130, %131, %cst_45 {dimension_numbers = #tpu.dot_dimension_numbers<[1], [0], [0], [1], [0, 0, 1, 1], [], []>} : vector<32x16xf32>, vector<16x128xf32>, vector<32x128xf32> -> vector<32x128xf32>
    %c0_46 = arith.constant 0 : index
    %c0_47 = arith.constant 0 : index
    %133 = vector.load %arg6[%c0_46, %c0_47] : memref<1x128xf32, #tpu.memory_space<vmem>>, vector<1x128xf32>
    %134 = vector.broadcast %133 : vector<1x128xf32> to vector<32x128xf32>
    %135 = arith.addf %132, %134 : vector<32x128xf32>
    %136 = math.tanh %135 : vector<32x128xf32>
    %c0_48 = arith.constant 0 : index
    %c0_49 = arith.constant 0 : index
    %137 = vector.load %arg7[%c0_48, %c0_49] : memref<128x1xf32, #tpu.memory_space<vmem>>, vector<128x1xf32>
    %cst_50 = arith.constant dense<0.000000e+00> : vector<32x1xf32>
    %138 = tpu.matmul %136, %137, %cst_50 {dimension_numbers = #tpu.dot_dimension_numbers<[1], [0], [0], [1], [0, 0, 1, 1], [], []>} : vector<32x128xf32>, vector<128x1xf32>, vector<32x1xf32> -> vector<32x1xf32>
    %139 = vector.extract_strided_slice %138 {offsets = [0, 0], sizes = [16, 1], strides = [1, 1]} : vector<32x1xf32> to vector<16x1xf32>
    %140 = vector.shape_cast %139 : vector<16x1xf32> to vector<1x16x1xf32>
    %cst_51 = arith.constant dense<0.000000e+00> : vector<1xf32>
    %141 = vector.multi_reduction <add>, %140, %cst_51 [1, 2] : vector<1x16x1xf32> to vector<1xf32>
    %142 = vector.shape_cast %141 : vector<1xf32> to vector<1x1x1xf32>
    %143 = vector.extract %142[0, 0, 0] : f32 from vector<1x1x1xf32>
    %144 = vector.broadcast %143 : f32 to vector<1x1xf32>
    %cst_52 = arith.constant 6.250000e-02 : f32
    %145 = vector.broadcast %cst_52 : f32 to vector<1x1xf32>
    %146 = arith.mulf %144, %145 : vector<1x1xf32>
    %147 = vector.extract_strided_slice %138 {offsets = [16, 0], sizes = [16, 1], strides = [1, 1]} : vector<32x1xf32> to vector<16x1xf32>
    %148 = vector.shape_cast %147 : vector<16x1xf32> to vector<1x16x1xf32>
    %cst_53 = arith.constant dense<0.000000e+00> : vector<1xf32>
    %149 = vector.multi_reduction <add>, %148, %cst_53 [1, 2] : vector<1x16x1xf32> to vector<1xf32>
    %150 = vector.shape_cast %149 : vector<1xf32> to vector<1x1x1xf32>
    %151 = vector.extract %150[0, 0, 0] : f32 from vector<1x1x1xf32>
    %152 = vector.broadcast %151 : f32 to vector<1x1xf32>
    %cst_54 = arith.constant 6.250000e-02 : f32
    %153 = vector.broadcast %cst_54 : f32 to vector<1x1xf32>
    %154 = arith.mulf %152, %153 : vector<1x1xf32>
    %155 = arith.maximumf %146, %154 : vector<1x1xf32>
    %156 = arith.subf %146, %155 : vector<1x1xf32>
    %157 = math.exp %156 : vector<1x1xf32>
    %158 = arith.subf %154, %155 : vector<1x1xf32>
    %159 = math.exp %158 : vector<1x1xf32>
    %160 = arith.addf %157, %159 : vector<1x1xf32>
    %161 = arith.divf %157, %160 : vector<1x1xf32>
    %162 = arith.divf %159, %160 : vector<1x1xf32>
    %163 = vector.broadcast %161 : vector<1x1xf32> to vector<16x16xf32>
    %164 = arith.mulf %163, %73 : vector<16x16xf32>
    %165 = vector.broadcast %162 : vector<1x1xf32> to vector<16x16xf32>
    %166 = arith.mulf %165, %129 : vector<16x16xf32>
    %167 = arith.addf %164, %166 : vector<16x16xf32>
    %c0_55 = arith.constant 0 : index
    %c0_56 = arith.constant 0 : index
    %168 = vector.load %arg8[%c0_55, %c0_56] : memref<16x32xf32, #tpu.memory_space<vmem>>, vector<16x32xf32>
    %cst_57 = arith.constant dense<0.000000e+00> : vector<16x32xf32>
    %169 = tpu.matmul %167, %168, %cst_57 {dimension_numbers = #tpu.dot_dimension_numbers<[1], [0], [0], [1], [0, 0, 1, 1], [], []>} : vector<16x16xf32>, vector<16x32xf32>, vector<16x32xf32> -> vector<16x32xf32>
    %c0_58 = arith.constant 0 : index
    %c0_59 = arith.constant 0 : index
    %170 = vector.load %arg9[%c0_58, %c0_59] : memref<32x8xf32, #tpu.memory_space<vmem>>, vector<32x8xf32>
    %cst_60 = arith.constant dense<0.000000e+00> : vector<16x8xf32>
    %171 = tpu.matmul %169, %170, %cst_60 {dimension_numbers = #tpu.dot_dimension_numbers<[1], [0], [0], [1], [0, 0, 1, 1], [], []>} : vector<16x32xf32>, vector<32x8xf32>, vector<16x8xf32> -> vector<16x8xf32>
    %172 = tpu.transpose %171, [1, 0] : vector<16x8xf32> -> vector<8x16xf32>
    %173 = vector.extract_strided_slice %169 {offsets = [0, 0], sizes = [16, 16], strides = [1, 1]} : vector<16x32xf32> to vector<16x16xf32>
    %174 = vector.extract_strided_slice %172 {offsets = [0, 0], sizes = [1, 16], strides = [1, 1]} : vector<8x16xf32> to vector<1x16xf32>
    %175 = vector.extract_strided_slice %171 {offsets = [0, 1], sizes = [16, 1], strides = [1, 1]} : vector<16x8xf32> to vector<16x1xf32>
    %176 = vector.broadcast %175 : vector<16x1xf32> to vector<16x16xf32>
    %177 = vector.broadcast %174 : vector<1x16xf32> to vector<16x16xf32>
    %178 = arith.addf %176, %177 : vector<16x16xf32>
    %cst_61 = arith.constant 2.000000e-01 : f32
    %179 = vector.broadcast %cst_61 : f32 to vector<16x16xf32>
    %180 = arith.mulf %179, %178 : vector<16x16xf32>
    %181 = arith.maximumf %178, %180 : vector<16x16xf32>
    %182 = arith.addf %181, %6 : vector<16x16xf32>
    %cst_62 = arith.constant dense<0xFF800000> : vector<16xf32>
    %183 = vector.multi_reduction <maximumf>, %182, %cst_62 [1] : vector<16x16xf32> to vector<16xf32>
    %184 = vector.shape_cast %183 : vector<16xf32> to vector<16x1xf32>
    %185 = vector.broadcast %184 : vector<16x1xf32> to vector<16x16xf32>
    %186 = arith.subf %182, %185 : vector<16x16xf32>
    %187 = math.exp %186 : vector<16x16xf32>
    %cst_63 = arith.constant dense<0.000000e+00> : vector<16xf32>
    %188 = vector.multi_reduction <add>, %187, %cst_63 [1] : vector<16x16xf32> to vector<16xf32>
    %189 = vector.shape_cast %188 : vector<16xf32> to vector<16x1xf32>
    %190 = tpu.reciprocal %189 {approx = true} : vector<16x1xf32> -> vector<16x1xf32>
    %191 = vector.broadcast %190 : vector<16x1xf32> to vector<16x16xf32>
    %192 = arith.mulf %187, %191 : vector<16x16xf32>
    %193 = vector.extract_strided_slice %173 {offsets = [0, 0], sizes = [16, 8], strides = [1, 1]} : vector<16x16xf32> to vector<16x8xf32>
    %cst_64 = arith.constant dense<0.000000e+00> : vector<16x8xf32>
    %194 = tpu.matmul %192, %193, %cst_64 {dimension_numbers = #tpu.dot_dimension_numbers<[1], [0], [0], [1], [0, 0, 1, 1], [], []>} : vector<16x16xf32>, vector<16x8xf32>, vector<16x8xf32> -> vector<16x8xf32>
    %195 = vector.extract_strided_slice %172 {offsets = [2, 0], sizes = [1, 16], strides = [1, 1]} : vector<8x16xf32> to vector<1x16xf32>
    %196 = vector.extract_strided_slice %171 {offsets = [0, 3], sizes = [16, 1], strides = [1, 1]} : vector<16x8xf32> to vector<16x1xf32>
    %197 = vector.broadcast %196 : vector<16x1xf32> to vector<16x16xf32>
    %198 = vector.broadcast %195 : vector<1x16xf32> to vector<16x16xf32>
    %199 = arith.addf %197, %198 : vector<16x16xf32>
    %cst_65 = arith.constant 2.000000e-01 : f32
    %200 = vector.broadcast %cst_65 : f32 to vector<16x16xf32>
    %201 = arith.mulf %200, %199 : vector<16x16xf32>
    %202 = arith.maximumf %199, %201 : vector<16x16xf32>
    %203 = arith.addf %202, %6 : vector<16x16xf32>
    %cst_66 = arith.constant dense<0xFF800000> : vector<16xf32>
    %204 = vector.multi_reduction <maximumf>, %203, %cst_66 [1] : vector<16x16xf32> to vector<16xf32>
    %205 = vector.shape_cast %204 : vector<16xf32> to vector<16x1xf32>
    %206 = vector.broadcast %205 : vector<16x1xf32> to vector<16x16xf32>
    %207 = arith.subf %203, %206 : vector<16x16xf32>
    %208 = math.exp %207 : vector<16x16xf32>
    %cst_67 = arith.constant dense<0.000000e+00> : vector<16xf32>
    %209 = vector.multi_reduction <add>, %208, %cst_67 [1] : vector<16x16xf32> to vector<16xf32>
    %210 = vector.shape_cast %209 : vector<16xf32> to vector<16x1xf32>
    %211 = tpu.reciprocal %210 {approx = true} : vector<16x1xf32> -> vector<16x1xf32>
    %212 = vector.broadcast %211 : vector<16x1xf32> to vector<16x16xf32>
    %213 = arith.mulf %208, %212 : vector<16x16xf32>
    %214 = vector.extract_strided_slice %173 {offsets = [0, 8], sizes = [16, 8], strides = [1, 1]} : vector<16x16xf32> to vector<16x8xf32>
    %cst_68 = arith.constant dense<0.000000e+00> : vector<16x8xf32>
    %215 = tpu.matmul %213, %214, %cst_68 {dimension_numbers = #tpu.dot_dimension_numbers<[1], [0], [0], [1], [0, 0, 1, 1], [], []>} : vector<16x16xf32>, vector<16x8xf32>, vector<16x8xf32> -> vector<16x8xf32>
    %216 = tpu.concatenate %194, %215 in 1 : vector<16x8xf32>, vector<16x8xf32> -> vector<16x16xf32>
    %c0_69 = arith.constant 0 : index
    %c0_70 = arith.constant 0 : index
    %c0_71 = arith.constant 0 : index
    %217 = vector.load %arg10[%c0_69, %c0_70, %c0_71] : memref<2x1x16xf32, #tpu.memory_space<vmem>>, vector<1x1x16xf32>
    %218 = vector.shape_cast %217 : vector<1x1x16xf32> to vector<1x16xf32>
    %219 = vector.broadcast %218 : vector<1x16xf32> to vector<16x16xf32>
    %220 = arith.addf %216, %219 : vector<16x16xf32>
    %cst_72 = arith.constant 0.000000e+00 : f32
    %221 = vector.broadcast %cst_72 : f32 to vector<16x16xf32>
    %222 = arith.cmpf ogt, %220, %221 : vector<16x16xf32>
    %cst_73 = arith.constant 0.000000e+00 : f32
    %223 = vector.broadcast %cst_73 : f32 to vector<16x16xf32>
    %224 = arith.minimumf %220, %223 : vector<16x16xf32>
    %225 = math.exp %224 : vector<16x16xf32>
    %cst_74 = arith.constant 1.000000e+00 : f32
    %226 = vector.broadcast %cst_74 : f32 to vector<16x16xf32>
    %227 = arith.subf %225, %226 : vector<16x16xf32>
    %228 = arith.select %222, %220, %227 : vector<16x16xi1>, vector<16x16xf32>
    %229 = vector.extract_strided_slice %169 {offsets = [0, 16], sizes = [16, 16], strides = [1, 1]} : vector<16x32xf32> to vector<16x16xf32>
    %230 = vector.extract_strided_slice %172 {offsets = [4, 0], sizes = [1, 16], strides = [1, 1]} : vector<8x16xf32> to vector<1x16xf32>
    %231 = vector.extract_strided_slice %171 {offsets = [0, 5], sizes = [16, 1], strides = [1, 1]} : vector<16x8xf32> to vector<16x1xf32>
    %232 = vector.broadcast %231 : vector<16x1xf32> to vector<16x16xf32>
    %233 = vector.broadcast %230 : vector<1x16xf32> to vector<16x16xf32>
    %234 = arith.addf %232, %233 : vector<16x16xf32>
    %cst_75 = arith.constant 2.000000e-01 : f32
    %235 = vector.broadcast %cst_75 : f32 to vector<16x16xf32>
    %236 = arith.mulf %235, %234 : vector<16x16xf32>
    %237 = arith.maximumf %234, %236 : vector<16x16xf32>
    %238 = arith.addf %237, %12 : vector<16x16xf32>
    %cst_76 = arith.constant dense<0xFF800000> : vector<16xf32>
    %239 = vector.multi_reduction <maximumf>, %238, %cst_76 [1] : vector<16x16xf32> to vector<16xf32>
    %240 = vector.shape_cast %239 : vector<16xf32> to vector<16x1xf32>
    %241 = vector.broadcast %240 : vector<16x1xf32> to vector<16x16xf32>
    %242 = arith.subf %238, %241 : vector<16x16xf32>
    %243 = math.exp %242 : vector<16x16xf32>
    %cst_77 = arith.constant dense<0.000000e+00> : vector<16xf32>
    %244 = vector.multi_reduction <add>, %243, %cst_77 [1] : vector<16x16xf32> to vector<16xf32>
    %245 = vector.shape_cast %244 : vector<16xf32> to vector<16x1xf32>
    %246 = tpu.reciprocal %245 {approx = true} : vector<16x1xf32> -> vector<16x1xf32>
    %247 = vector.broadcast %246 : vector<16x1xf32> to vector<16x16xf32>
    %248 = arith.mulf %243, %247 : vector<16x16xf32>
    %249 = vector.extract_strided_slice %229 {offsets = [0, 0], sizes = [16, 8], strides = [1, 1]} : vector<16x16xf32> to vector<16x8xf32>
    %cst_78 = arith.constant dense<0.000000e+00> : vector<16x8xf32>
    %250 = tpu.matmul %248, %249, %cst_78 {dimension_numbers = #tpu.dot_dimension_numbers<[1], [0], [0], [1], [0, 0, 1, 1], [], []>} : vector<16x16xf32>, vector<16x8xf32>, vector<16x8xf32> -> vector<16x8xf32>
    %251 = vector.extract_strided_slice %172 {offsets = [6, 0], sizes = [1, 16], strides = [1, 1]} : vector<8x16xf32> to vector<1x16xf32>
    %252 = vector.extract_strided_slice %171 {offsets = [0, 7], sizes = [16, 1], strides = [1, 1]} : vector<16x8xf32> to vector<16x1xf32>
    %253 = vector.broadcast %252 : vector<16x1xf32> to vector<16x16xf32>
    %254 = vector.broadcast %251 : vector<1x16xf32> to vector<16x16xf32>
    %255 = arith.addf %253, %254 : vector<16x16xf32>
    %cst_79 = arith.constant 2.000000e-01 : f32
    %256 = vector.broadcast %cst_79 : f32 to vector<16x16xf32>
    %257 = arith.mulf %256, %255 : vector<16x16xf32>
    %258 = arith.maximumf %255, %257 : vector<16x16xf32>
    %259 = arith.addf %258, %12 : vector<16x16xf32>
    %cst_80 = arith.constant dense<0xFF800000> : vector<16xf32>
    %260 = vector.multi_reduction <maximumf>, %259, %cst_80 [1] : vector<16x16xf32> to vector<16xf32>
    %261 = vector.shape_cast %260 : vector<16xf32> to vector<16x1xf32>
    %262 = vector.broadcast %261 : vector<16x1xf32> to vector<16x16xf32>
    %263 = arith.subf %259, %262 : vector<16x16xf32>
    %264 = math.exp %263 : vector<16x16xf32>
    %cst_81 = arith.constant dense<0.000000e+00> : vector<16xf32>
    %265 = vector.multi_reduction <add>, %264, %cst_81 [1] : vector<16x16xf32> to vector<16xf32>
    %266 = vector.shape_cast %265 : vector<16xf32> to vector<16x1xf32>
    %267 = tpu.reciprocal %266 {approx = true} : vector<16x1xf32> -> vector<16x1xf32>
    %268 = vector.broadcast %267 : vector<16x1xf32> to vector<16x16xf32>
    %269 = arith.mulf %264, %268 : vector<16x16xf32>
    %270 = vector.extract_strided_slice %229 {offsets = [0, 8], sizes = [16, 8], strides = [1, 1]} : vector<16x16xf32> to vector<16x8xf32>
    %cst_82 = arith.constant dense<0.000000e+00> : vector<16x8xf32>
    %271 = tpu.matmul %269, %270, %cst_82 {dimension_numbers = #tpu.dot_dimension_numbers<[1], [0], [0], [1], [0, 0, 1, 1], [], []>} : vector<16x16xf32>, vector<16x8xf32>, vector<16x8xf32> -> vector<16x8xf32>
    %272 = tpu.concatenate %250, %271 in 1 : vector<16x8xf32>, vector<16x8xf32> -> vector<16x16xf32>
    %c1_83 = arith.constant 1 : index
    %c0_84 = arith.constant 0 : index
    %c0_85 = arith.constant 0 : index
    %273 = vector.load %arg10[%c1_83, %c0_84, %c0_85] : memref<2x1x16xf32, #tpu.memory_space<vmem>>, vector<1x1x16xf32>
    %274 = vector.shape_cast %273 : vector<1x1x16xf32> to vector<1x16xf32>
    %275 = vector.broadcast %274 : vector<1x16xf32> to vector<16x16xf32>
    %276 = arith.addf %272, %275 : vector<16x16xf32>
    %cst_86 = arith.constant 0.000000e+00 : f32
    %277 = vector.broadcast %cst_86 : f32 to vector<16x16xf32>
    %278 = arith.cmpf ogt, %276, %277 : vector<16x16xf32>
    %cst_87 = arith.constant 0.000000e+00 : f32
    %279 = vector.broadcast %cst_87 : f32 to vector<16x16xf32>
    %280 = arith.minimumf %276, %279 : vector<16x16xf32>
    %281 = math.exp %280 : vector<16x16xf32>
    %cst_88 = arith.constant 1.000000e+00 : f32
    %282 = vector.broadcast %cst_88 : f32 to vector<16x16xf32>
    %283 = arith.subf %281, %282 : vector<16x16xf32>
    %284 = arith.select %278, %276, %283 : vector<16x16xi1>, vector<16x16xf32>
    %285 = tpu.concatenate %228, %284 in 0 : vector<16x16xf32>, vector<16x16xf32> -> vector<32x16xf32>
    %c0_89 = arith.constant 0 : index
    %c0_90 = arith.constant 0 : index
    %286 = vector.load %arg11[%c0_89, %c0_90] : memref<16x128xf32, #tpu.memory_space<vmem>>, vector<16x128xf32>
    %cst_91 = arith.constant dense<0.000000e+00> : vector<32x128xf32>
    %287 = tpu.matmul %285, %286, %cst_91 {dimension_numbers = #tpu.dot_dimension_numbers<[1], [0], [0], [1], [0, 0, 1, 1], [], []>} : vector<32x16xf32>, vector<16x128xf32>, vector<32x128xf32> -> vector<32x128xf32>
    %c0_92 = arith.constant 0 : index
    %c0_93 = arith.constant 0 : index
    %288 = vector.load %arg12[%c0_92, %c0_93] : memref<1x128xf32, #tpu.memory_space<vmem>>, vector<1x128xf32>
    %289 = vector.broadcast %288 : vector<1x128xf32> to vector<32x128xf32>
    %290 = arith.addf %287, %289 : vector<32x128xf32>
    %291 = math.tanh %290 : vector<32x128xf32>
    %c0_94 = arith.constant 0 : index
    %c0_95 = arith.constant 0 : index
    %292 = vector.load %arg13[%c0_94, %c0_95] : memref<128x1xf32, #tpu.memory_space<vmem>>, vector<128x1xf32>
    %cst_96 = arith.constant dense<0.000000e+00> : vector<32x1xf32>
    %293 = tpu.matmul %291, %292, %cst_96 {dimension_numbers = #tpu.dot_dimension_numbers<[1], [0], [0], [1], [0, 0, 1, 1], [], []>} : vector<32x128xf32>, vector<128x1xf32>, vector<32x1xf32> -> vector<32x1xf32>
    %294 = vector.extract_strided_slice %293 {offsets = [0, 0], sizes = [16, 1], strides = [1, 1]} : vector<32x1xf32> to vector<16x1xf32>
    %295 = vector.shape_cast %294 : vector<16x1xf32> to vector<1x16x1xf32>
    %cst_97 = arith.constant dense<0.000000e+00> : vector<1xf32>
    %296 = vector.multi_reduction <add>, %295, %cst_97 [1, 2] : vector<1x16x1xf32> to vector<1xf32>
    %297 = vector.shape_cast %296 : vector<1xf32> to vector<1x1x1xf32>
    %298 = vector.extract %297[0, 0, 0] : f32 from vector<1x1x1xf32>
    %299 = vector.broadcast %298 : f32 to vector<1x1xf32>
    %cst_98 = arith.constant 6.250000e-02 : f32
    %300 = vector.broadcast %cst_98 : f32 to vector<1x1xf32>
    %301 = arith.mulf %299, %300 : vector<1x1xf32>
    %302 = vector.extract_strided_slice %293 {offsets = [16, 0], sizes = [16, 1], strides = [1, 1]} : vector<32x1xf32> to vector<16x1xf32>
    %303 = vector.shape_cast %302 : vector<16x1xf32> to vector<1x16x1xf32>
    %cst_99 = arith.constant dense<0.000000e+00> : vector<1xf32>
    %304 = vector.multi_reduction <add>, %303, %cst_99 [1, 2] : vector<1x16x1xf32> to vector<1xf32>
    %305 = vector.shape_cast %304 : vector<1xf32> to vector<1x1x1xf32>
    %306 = vector.extract %305[0, 0, 0] : f32 from vector<1x1x1xf32>
    %307 = vector.broadcast %306 : f32 to vector<1x1xf32>
    %cst_100 = arith.constant 6.250000e-02 : f32
    %308 = vector.broadcast %cst_100 : f32 to vector<1x1xf32>
    %309 = arith.mulf %307, %308 : vector<1x1xf32>
    %310 = arith.maximumf %301, %309 : vector<1x1xf32>
    %311 = arith.subf %301, %310 : vector<1x1xf32>
    %312 = math.exp %311 : vector<1x1xf32>
    %313 = arith.subf %309, %310 : vector<1x1xf32>
    %314 = math.exp %313 : vector<1x1xf32>
    %315 = arith.addf %312, %314 : vector<1x1xf32>
    %316 = arith.divf %312, %315 : vector<1x1xf32>
    %317 = arith.divf %314, %315 : vector<1x1xf32>
    %318 = vector.broadcast %316 : vector<1x1xf32> to vector<16x16xf32>
    %319 = arith.mulf %318, %228 : vector<16x16xf32>
    %320 = vector.broadcast %317 : vector<1x1xf32> to vector<16x16xf32>
    %321 = arith.mulf %320, %284 : vector<16x16xf32>
    %322 = arith.addf %319, %321 : vector<16x16xf32>
    %c0_101 = arith.constant 0 : index
    %c0_102 = arith.constant 0 : index
    %323 = vector.load %arg14[%c0_101, %c0_102] : memref<16x4xf32, #tpu.memory_space<vmem>>, vector<16x4xf32>
    %cst_103 = arith.constant dense<0.000000e+00> : vector<16x4xf32>
    %324 = tpu.matmul %322, %323, %cst_103 {dimension_numbers = #tpu.dot_dimension_numbers<[1], [0], [0], [1], [0, 0, 1, 1], [], []>} : vector<16x16xf32>, vector<16x4xf32>, vector<16x4xf32> -> vector<16x4xf32>
    %c0_104 = arith.constant 0 : index
    %c0_105 = arith.constant 0 : index
    %325 = vector.load %arg15[%c0_104, %c0_105] : memref<1x4xf32, #tpu.memory_space<vmem>>, vector<1x4xf32>
    %326 = vector.broadcast %325 : vector<1x4xf32> to vector<16x4xf32>
    %327 = arith.addf %324, %326 : vector<16x4xf32>
    %c0_106 = arith.constant 0 : index
    %c0_107 = arith.constant 0 : index
    %328 = vector.load %arg16[%c0_106, %c0_107] : memref<16x4xf32, #tpu.memory_space<vmem>>, vector<16x4xf32>
    tpu.vector_store %arg16[%c0_106, %c0_107], %327 {strides = array<i32>} : memref<16x4xf32, #tpu.memory_space<vmem>>, vector<16x4xf32>,
    return
  }
}

</mosaic_0001>

<llo_original>
// kernel: tpu_custom_call.1
$region0: #{tpu_custom_call.1}
  #allocation0 [shape = 'u32[]', space=smem, size = 0x4, offset = 0x4, fixed_abs, tag = 'smem constant byte address 0x4 - core index']
  #allocation1 [shape = 'u32[144,128]{1,0:T(1,128)}', space=vmem, size = 0x12000, scoped, tag = 'internal scratch']
  %s0 = inlined_call_operand.vmem [shape: f32[16,16], index: 0, kind: input, shape index: {}]
  %s1 = inlined_call_operand.vmem [shape: f32[2,16,16], index: 1, kind: input, shape index: {}]
  %s2 = inlined_call_operand.vmem [shape: f32[16,32], index: 2, kind: input, shape index: {}]
  %s3 = inlined_call_operand.vmem [shape: f32[32,8], index: 3, kind: input, shape index: {}]
  %s4 = inlined_call_operand.vmem [shape: f32[2,1,16], index: 4, kind: input, shape index: {}]
  %s5 = inlined_call_operand.vmem [shape: f32[16,128], index: 5, kind: input, shape index: {}]
  %s6 = inlined_call_operand.vmem [shape: f32[1,128], index: 6, kind: input, shape index: {}]
  %s7 = inlined_call_operand.vmem [shape: f32[128,1], index: 7, kind: input, shape index: {}]
  %s8 = inlined_call_operand.vmem [shape: f32[16,32], index: 8, kind: input, shape index: {}]
  %s9 = inlined_call_operand.vmem [shape: f32[32,8], index: 9, kind: input, shape index: {}]
  %s10 = inlined_call_operand.vmem [shape: f32[2,1,16], index: 10, kind: input, shape index: {}]
  %s11 = inlined_call_operand.vmem [shape: f32[16,128], index: 11, kind: input, shape index: {}]
  %s12 = inlined_call_operand.vmem [shape: f32[1,128], index: 12, kind: input, shape index: {}]
  %s13 = inlined_call_operand.vmem [shape: f32[128,1], index: 13, kind: input, shape index: {}]
  %s14 = inlined_call_operand.vmem [shape: f32[16,4], index: 14, kind: input, shape index: {}]
  %s15 = inlined_call_operand.vmem [shape: f32[1,4], index: 15, kind: input, shape index: {}]
  %s16 = inlined_call_operand.vmem [shape: f32[16,4], index: 16, kind: output, shape index: {}]
  %s17 = sld [smem:[#allocation0]]
  $region74: #{tpu_custom_call.1} parent=0
    _
  %s19 = ssub.s32 1, %s17
  %s20 = scalar_select 0, %s19, %s17
  // Predicated region
  $region2: #{tpu_custom_call.1} parent=0 // pred_check
    _
  $region3: #{tpu_custom_call.1} parent=0 // pred_check_branch
    %22 = sbr.rel (0) target = $region5
  $region4: #{tpu_custom_call.1} parent=0 // pred_region
    _
  $region5: #{tpu_custom_call.1} parent=0 // pred_fallthru
    _
  // Predicated region
  $region6: #{tpu_custom_call.1} parent=0 // pred_check
    _
  $region7: #{tpu_custom_call.1} parent=0 // pred_check_branch
    %24 = sbr.rel (0) target = $region9
  $region8: #{tpu_custom_call.1} parent=0 // pred_region
    _
  $region9: #{tpu_custom_call.1} parent=0 // pred_fallthru
    _
  // Predicated region
  $region10: #{tpu_custom_call.1} parent=0 // pred_check
    _
  $region11: #{tpu_custom_call.1} parent=0 // pred_check_branch
    %26 = sbr.rel (0) target = $region13
  $region12: #{tpu_custom_call.1} parent=0 // pred_region
    _
  $region13: #{tpu_custom_call.1} parent=0 // pred_fallthru
    _
  // Predicated region
  $region14: #{tpu_custom_call.1} parent=0 // pred_check
    _
  $region15: #{tpu_custom_call.1} parent=0 // pred_check_branch
    %28 = sbr.rel (0) target = $region17
  $region16: #{tpu_custom_call.1} parent=0 // pred_region
    _
  $region17: #{tpu_custom_call.1} parent=0 // pred_fallthru
    _
  // Predicated region
  $region18: #{tpu_custom_call.1} parent=0 // pred_check
    _
  $region19: #{tpu_custom_call.1} parent=0 // pred_check_branch
    %30 = sbr.rel (0) target = $region21
  $region20: #{tpu_custom_call.1} parent=0 // pred_region
    _
  $region21: #{tpu_custom_call.1} parent=0 // pred_fallthru
    _
  // Predicated region
  $region22: #{tpu_custom_call.1} parent=0 // pred_check
    _
  $region23: #{tpu_custom_call.1} parent=0 // pred_check_branch
    %32 = sbr.rel (0) target = $region25
  $region24: #{tpu_custom_call.1} parent=0 // pred_region
    _
  $region25: #{tpu_custom_call.1} parent=0 // pred_fallthru
    _
  // Predicated region
  $region26: #{tpu_custom_call.1} parent=0 // pred_check
    _
  $region27: #{tpu_custom_call.1} parent=0 // pred_check_branch
    %34 = sbr.rel (0) target = $region29
  $region28: #{tpu_custom_call.1} parent=0 // pred_region
    _
  $region29: #{tpu_custom_call.1} parent=0 // pred_fallthru
    _
  // Predicated region
  $region30: #{tpu_custom_call.1} parent=0 // pred_check
    _
  $region31: #{tpu_custom_call.1} parent=0 // pred_check_branch
    %36 = sbr.rel (0) target = $region33
  $region32: #{tpu_custom_call.1} parent=0 // pred_region
    _
  $region33: #{tpu_custom_call.1} parent=0 // pred_fallthru
    _
  // Predicated region
  $region34: #{tpu_custom_call.1} parent=0 // pred_check
    _
  $region35: #{tpu_custom_call.1} parent=0 // pred_check_branch
    %38 = sbr.rel (0) target = $region37
  $region36: #{tpu_custom_call.1} parent=0 // pred_region
    _
  $region37: #{tpu_custom_call.1} parent=0 // pred_fallthru
    _
  // Predicated region
  $region38: #{tpu_custom_call.1} parent=0 // pred_check
    _
  $region39: #{tpu_custom_call.1} parent=0 // pred_check_branch
    %40 = sbr.rel (0) target = $region41
  $region40: #{tpu_custom_call.1} parent=0 // pred_region
    _
  $region41: #{tpu_custom_call.1} parent=0 // pred_fallthru
    _
  // Predicated region
  $region42: #{tpu_custom_call.1} parent=0 // pred_check
    _
  $region43: #{tpu_custom_call.1} parent=0 // pred_check_branch
    %42 = sbr.rel (0) target = $region45
  $region44: #{tpu_custom_call.1} parent=0 // pred_region
    _
  $region45: #{tpu_custom_call.1} parent=0 // pred_fallthru
    _
  // Predicated region
  $region46: #{tpu_custom_call.1} parent=0 // pred_check
    _
  $region47: #{tpu_custom_call.1} parent=0 // pred_check_branch
    %44 = sbr.rel (0) target = $region49
  $region48: #{tpu_custom_call.1} parent=0 // pred_region
    _
  $region49: #{tpu_custom_call.1} parent=0 // pred_fallthru
    _
  // Predicated region
  $region50: #{tpu_custom_call.1} parent=0 // pred_check
    _
  $region51: #{tpu_custom_call.1} parent=0 // pred_check_branch
    %46 = sbr.rel (0) target = $region53
  $region52: #{tpu_custom_call.1} parent=0 // pred_region
    _
  $region53: #{tpu_custom_call.1} parent=0 // pred_fallthru
    _
  // Predicated region
  $region54: #{tpu_custom_call.1} parent=0 // pred_check
    _
  $region55: #{tpu_custom_call.1} parent=0 // pred_check_branch
    %48 = sbr.rel (0) target = $region57
  $region56: #{tpu_custom_call.1} parent=0 // pred_region
    _
  $region57: #{tpu_custom_call.1} parent=0 // pred_fallthru
    _
  // Predicated region
  $region58: #{tpu_custom_call.1} parent=0 // pred_check
    _
  $region59: #{tpu_custom_call.1} parent=0 // pred_check_branch
    %50 = sbr.rel (0) target = $region61
  $region60: #{tpu_custom_call.1} parent=0 // pred_region
    _
  $region61: #{tpu_custom_call.1} parent=0 // pred_fallthru
    _
  // Predicated region
  $region62: #{tpu_custom_call.1} parent=0 // pred_check
    _
  $region63: #{tpu_custom_call.1} parent=0 // pred_check_branch
    %52 = sbr.rel (0) target = $region65
  $region64: #{tpu_custom_call.1} parent=0 // pred_region
    _
  $region65: #{tpu_custom_call.1} parent=0 // pred_fallthru
    _
  %v53 = vld [vmem:[%s0] sm:$0xff]
  %v54 = vld [vmem:[%s0 + $0x8] sm:$0xff]
  %v55 = vld [vmem:[%s1] sm:$0xff]
  %v56 = vld [vmem:[%s1 + $0x8] sm:$0xff]
  %v57 = vsub.f32 %v55, 1.0
  %v58 = vsub.f32 %v56, 1.0
  %v59 = vmul.f32 %v57, 1e+30
  %v60 = vmul.f32 %v58, 1e+30
  %s61 = scalar_lea.vmem %s1, 16
  %v62 = vld [vmem:[%s61] sm:$0xff]
  %v63 = vld [vmem:[%s61 + $0x8] sm:$0xff]
  %v64 = vsub.f32 %v62, 1.0
  %v65 = vsub.f32 %v63, 1.0
  %v66 = vmul.f32 %v64, 1e+30
  %v67 = vmul.f32 %v65, 1e+30
  %v68 = vld [vmem:[%s2] sm:$0xff]
  %v69 = vld [vmem:[%s2 + $0x8] sm:$0xff]
  %vm70 = vcmask 130048
  %v72 = vsel %vm70, %v53, 0
  %v75 = vsel %vm70, %v54, 0
  %77 = vmatprep.subr.mxu0 0.0
  %78 = vmatpush1.msra.mxu0 0.0
  %79 = vmatprep.subr.mxu0 0.0
  %80 = vmatpush1.msra.mxu0 0.0
  %81 = vmatprep.subr.mxu0 0.0
  %82 = vmatpush1.msra.mxu0 0.0
  %83 = vmatprep.subr.mxu0 0.0
  %84 = vmatpush1.msra.mxu0 0.0
  %85 = vmatprep.subr.mxu0 0.0
  %86 = vmatpush1.msra.mxu0 0.0
  %87 = vmatprep.subr.mxu0 0.0
  %88 = vmatpush1.msra.mxu0 0.0
  %89 = vmatprep.subr.mxu0 0.0
  %90 = vmatpush1.msra.mxu0 0.0
  %91 = vmatprep.subr.mxu0 0.0
  %92 = vmatpush1.msra.mxu0 0.0
  %93 = vmatprep.subr.mxu0 0.0
  %94 = vmatpush1.msra.mxu0 0.0
  %95 = vmatprep.subr.mxu0 0.0
  %96 = vmatpush1.msra.mxu0 0.0
  %97 = vmatprep.subr.mxu0 0.0
  %98 = vmatpush1.msra.mxu0 0.0
  %99 = vmatprep.subr.mxu0 0.0
  %100 = vmatpush1.msra.mxu0 0.0
  %101 = vmatprep.subr.mxu0 0.0
  %102 = vmatpush1.msra.mxu0 0.0
  %103 = vmatprep.subr.mxu0 0.0
  %104 = vmatpush1.msra.mxu0 0.0
  %105 = vmatprep.subr.mxu0 0.0
  %106 = vmatpush1.msra.mxu0 %v69
  %107 = vmatprep.subr.mxu0 0.0
  %108 = vmatpush1.msra.mxu0 %v68
  %109 = vmatprep.subr.mxu0 0.0
  %110 = vmatpush2.msra.mxu0 0.0
  %111 = vmatprep.subr.mxu0 0.0
  %112 = vmatpush2.msra.mxu0 0.0
  %113 = vmatprep.subr.mxu0 0.0
  %114 = vmatpush2.msra.mxu0 0.0
  %115 = vmatprep.subr.mxu0 0.0
  %116 = vmatpush2.msra.mxu0 0.0
  %117 = vmatprep.subr.mxu0 0.0
  %118 = vmatpush2.msra.mxu0 0.0
  %119 = vmatprep.subr.mxu0 0.0
  %120 = vmatpush2.msra.mxu0 0.0
  %121 = vmatprep.subr.mxu0 0.0
  %122 = vmatpush2.msra.mxu0 0.0
  %123 = vmatprep.subr.mxu0 0.0
  %124 = vmatpush2.msra.mxu0 0.0
  %125 = vmatprep.subr.mxu0 0.0
  %126 = vmatpush2.msra.mxu0 0.0
  %127 = vmatprep.subr.mxu0 0.0
  %128 = vmatpush2.msra.mxu0 0.0
  %129 = vmatprep.subr.mxu0 0.0
  %130 = vmatpush2.msra.mxu0 0.0
  %131 = vmatprep.subr.mxu0 0.0
  %132 = vmatpush2.msra.mxu0 0.0
  %133 = vmatprep.subr.mxu0 0.0
  %134 = vmatpush2.msra.mxu0 0.0
  %135 = vmatprep.subr.mxu0 0.0
  %136 = vmatpush2.msra.mxu0 0.0
  %137 = vmatprep.subr.mxu0 0.0
  %138 = vmatpush2.msra.mxu0 0.0
  %139 = vmatprep.subr.mxu0 0.0
  %140 = vmatpush2.msra.mxu0 0.0
  %141 = vmatprep.mubr.f32.mxu0 0.0
  %142 = vmatmul.mubr.f32.gmra.mxu0 %v72
  %v143 = vpop.f32.mrf.mxu0
  %v144 = vadd.f32 0.0, %v143
  %v145 = vpop.f32.mrf.mxu0
  %146 = vmatprep.mubr.f32.mxu0 0.0
  %147 = vmatmul.mubr.f32.gmra.mxu0 %v75
  %v148 = vpop.f32.mrf.mxu0
  %v149 = vadd.f32 0.0, %v148
  %v150 = vpop.f32.mrf.mxu0
  %151 = vdwg.mxu0
  %v152 = vld [vmem:[%s3] sm:$0xff]
  %v153 = vld [vmem:[%s3 + $0x8] sm:$0xff]
  %v154 = vld [vmem:[%s3 + $0x10] sm:$0xff]
  %v155 = vld [vmem:[%s3 + $0x18] sm:$0xff]
  %vm156 = vcmask 261120
  %v158 = vsel %vm156, %v144, 0
  %v161 = vsel %vm156, %v149, 0
  %163 = vmatprep.subr.mxu0 0.0
  %164 = vmatpush1.msra.mxu0 0.0
  %165 = vmatprep.subr.mxu0 0.0
  %166 = vmatpush1.msra.mxu0 0.0
  %167 = vmatprep.subr.mxu0 0.0
  %168 = vmatpush1.msra.mxu0 0.0
  %169 = vmatprep.subr.mxu0 0.0
  %170 = vmatpush1.msra.mxu0 0.0
  %171 = vmatprep.subr.mxu0 0.0
  %172 = vmatpush1.msra.mxu0 0.0
  %173 = vmatprep.subr.mxu0 0.0
  %174 = vmatpush1.msra.mxu0 0.0
  %175 = vmatprep.subr.mxu0 0.0
  %176 = vmatpush1.msra.mxu0 0.0
  %177 = vmatprep.subr.mxu0 0.0
  %178 = vmatpush1.msra.mxu0 0.0
  %179 = vmatprep.subr.mxu0 0.0
  %180 = vmatpush1.msra.mxu0 0.0
  %181 = vmatprep.subr.mxu0 0.0
  %182 = vmatpush1.msra.mxu0 0.0
  %183 = vmatprep.subr.mxu0 0.0
  %184 = vmatpush1.msra.mxu0 0.0
  %185 = vmatprep.subr.mxu0 0.0
  %186 = vmatpush1.msra.mxu0 0.0
  %187 = vmatprep.subr.mxu0 0.0
  %188 = vmatpush1.msra.mxu0 %v155
  %189 = vmatprep.subr.mxu0 0.0
  %190 = vmatpush1.msra.mxu0 %v154
  %191 = vmatprep.subr.mxu0 0.0
  %192 = vmatpush1.msra.mxu0 %v153
  %193 = vmatprep.subr.mxu0 0.0
  %194 = vmatpush1.msra.mxu0 %v152
  %195 = vmatprep.subr.mxu0 0.0
  %196 = vmatpush2.msra.mxu0 0.0
  %197 = vmatprep.subr.mxu0 0.0
  %198 = vmatpush2.msra.mxu0 0.0
  %199 = vmatprep.subr.mxu0 0.0
  %200 = vmatpush2.msra.mxu0 0.0
  %201 = vmatprep.subr.mxu0 0.0
  %202 = vmatpush2.msra.mxu0 0.0
  %203 = vmatprep.subr.mxu0 0.0
  %204 = vmatpush2.msra.mxu0 0.0
  %205 = vmatprep.subr.mxu0 0.0
  %206 = vmatpush2.msra.mxu0 0.0
  %207 = vmatprep.subr.mxu0 0.0
  %208 = vmatpush2.msra.mxu0 0.0
  %209 = vmatprep.subr.mxu0 0.0
  %210 = vmatpush2.msra.mxu0 0.0
  %211 = vmatprep.subr.mxu0 0.0
  %212 = vmatpush2.msra.mxu0 0.0
  %213 = vmatprep.subr.mxu0 0.0
  %214 = vmatpush2.msra.mxu0 0.0
  %215 = vmatprep.subr.mxu0 0.0
  %216 = vmatpush2.msra.mxu0 0.0
  %217 = vmatprep.subr.mxu0 0.0
  %218 = vmatpush2.msra.mxu0 0.0
  %219 = vmatprep.subr.mxu0 0.0
  %220 = vmatpush2.msra.mxu0 0.0
  %221 = vmatprep.subr.mxu0 0.0
  %222 = vmatpush2.msra.mxu0 0.0
  %223 = vmatprep.subr.mxu0 0.0
  %224 = vmatpush2.msra.mxu0 0.0
  %225 = vmatprep.subr.mxu0 0.0
  %226 = vmatpush2.msra.mxu0 0.0
  %227 = vmatprep.mubr.f32.mxu0 0.0
  %228 = vmatmul.mubr.f32.gmra.mxu0 %v158
  %v229 = vpop.f32.mrf.mxu0
  %v230 = vadd.f32 0.0, %v229
  %v231 = vpop.f32.mrf.mxu0
  %232 = vmatprep.mubr.f32.mxu0 0.0
  %233 = vmatmul.mubr.f32.gmra.mxu0 %v161
  %v234 = vpop.f32.mrf.mxu0
  %v235 = vadd.f32 0.0, %v234
  %v236 = vpop.f32.mrf.mxu0
  %237 = vdwg.mxu0
  %238 = vxpose.xlu0.b32.start [1/16] %v230, 128
  %239 = vxpose.xlu0.b32.cont [2/16] %v235, 128
  %240 = vxpose.xlu0.b32.cont [3/16] 0.0, 128
  %241 = vxpose.xlu0.b32.cont [4/16] 0.0, 128
  %242 = vxpose.xlu0.b32.cont [5/16] 0.0, 128
  %243 = vxpose.xlu0.b32.cont [6/16] 0.0, 128
  %244 = vxpose.xlu0.b32.cont [7/16] 0.0, 128
  %245 = vxpose.xlu0.b32.cont [8/16] 0.0, 128
  %246 = vxpose.xlu0.b32.cont [9/16] 0.0, 128
  %247 = vxpose.xlu0.b32.cont [10/16] 0.0, 128
  %248 = vxpose.xlu0.b32.cont [11/16] 0.0, 128
  %249 = vxpose.xlu0.b32.cont [12/16] 0.0, 128
  %250 = vxpose.xlu0.b32.cont [13/16] 0.0, 128
  %251 = vxpose.xlu0.b32.cont [14/16] 0.0, 128
  %252 = vxpose.xlu0.b32.cont [15/16] 0.0, 128
  %253 = vxpose.xlu0.b32.end [16/16] 0.0, 128
  %v254 = vpop.trf.xlu0
  %v255 = vpop.trf.xlu0
  %v256 = vpop.trf.xlu0
  %v257 = vpop.trf.xlu0
  %v258 = vpop.trf.xlu0
  %v259 = vpop.trf.xlu0
  %v260 = vpop.trf.xlu0
  %v261 = vpop.trf.xlu0
  %v262 = vpop.trf.xlu0
  %v263 = vpop.trf.xlu0
  %v264 = vpop.trf.xlu0
  %v265 = vpop.trf.xlu0
  %v266 = vpop.trf.xlu0
  %v267 = vpop.trf.xlu0
  %v268 = vpop.trf.xlu0
  %v269 = vpop.trf.xlu0
  %271 = vset.pattern.permute.xlu0 1
  %272 = vperm.xlu0 %271, %v230
  %v273 = vpop.permute.xlu0 %272
  %276 = vset.pattern.permute.xlu0 1
  %277 = vperm.xlu0 %276, %v235
  %v278 = vpop.permute.xlu0 %277
  %v280 = vlaneseq
  %v281 = vshrl.u32 %v280, 7
  %v282 = vsub.s32 0, %v281
  %v283 = vrot.slane %v254, %v282
  %v284 = vadd.f32 %v273, %v283
  %v285 = vadd.f32 %v278, %v283
  %v286 = vmul.f32 %v284, 0.2
  %v287 = vmul.f32 %v285, 0.2
  %v288 = vmax.f32 %v284, %v286
  %v289 = vmax.f32 %v285, %v287
  %v290 = vadd.f32 %v288, %v59
  %v291 = vadd.f32 %v289, %v60
  %v292 = vsel %vm70, %v290, -inf
  %293 = vmax.xlane.f32.xlu0 %v292
  %v294 = vpop.xlane.xlu0 %293
  %v295 = vsel %vm70, %v291, -inf
  %296 = vmax.xlane.f32.xlu0 %v295
  %v297 = vpop.xlane.xlu0 %296
  %v298 = vsub.f32 %v290, %v294
  %v299 = vsub.f32 %v291, %v297
  %v300 = vmul.f32 %v298, 1.442695
  %v301 = vpow.pop %v300
  %v302 = vmul.f32 %v299, 1.442695
  %v303 = vpow.pop %v302
  %v304 = vsel %vm70, %v301, 0.0
  %305 = vadd.xlane.f32.xlu0 %v304
  %v306 = vpop.xlane.xlu0 %305
  %v307 = vsel %vm70, %v303, 0.0
  %308 = vadd.xlane.f32.xlu0 %v307
  %v309 = vpop.xlane.xlu0 %308
  %v310 = vrcp.pop %v306
  %v311 = vrcp.pop %v309
  %v312 = vmul.f32 %v301, %v310
  %v313 = vmul.f32 %v303, %v311
  %v315 = vsel %vm70, %v312, 0
  %v318 = vsel %vm70, %v313, 0
  %320 = vmatprep.subr.mxu0 0.0
  %321 = vmatpush1.msra.mxu0 0.0
  %322 = vmatprep.subr.mxu0 0.0
  %323 = vmatpush1.msra.mxu0 0.0
  %324 = vmatprep.subr.mxu0 0.0
  %325 = vmatpush1.msra.mxu0 0.0
  %326 = vmatprep.subr.mxu0 0.0
  %327 = vmatpush1.msra.mxu0 0.0
  %328 = vmatprep.subr.mxu0 0.0
  %329 = vmatpush1.msra.mxu0 0.0
  %330 = vmatprep.subr.mxu0 0.0
  %331 = vmatpush1.msra.mxu0 0.0
  %332 = vmatprep.subr.mxu0 0.0
  %333 = vmatpush1.msra.mxu0 0.0
  %334 = vmatprep.subr.mxu0 0.0
  %335 = vmatpush1.msra.mxu0 0.0
  %336 = vmatprep.subr.mxu0 0.0
  %337 = vmatpush1.msra.mxu0 0.0
  %338 = vmatprep.subr.mxu0 0.0
  %339 = vmatpush1.msra.mxu0 0.0
  %340 = vmatprep.subr.mxu0 0.0
  %341 = vmatpush1.msra.mxu0 0.0
  %342 = vmatprep.subr.mxu0 0.0
  %343 = vmatpush1.msra.mxu0 0.0
  %344 = vmatprep.subr.mxu0 0.0
  %345 = vmatpush1.msra.mxu0 0.0
  %346 = vmatprep.subr.mxu0 0.0
  %347 = vmatpush1.msra.mxu0 0.0
  %348 = vmatprep.subr.mxu0 0.0
  %349 = vmatpush1.msra.mxu0 %v149
  %350 = vmatprep.subr.mxu0 0.0
  %351 = vmatpush1.msra.mxu0 %v144
  %352 = vmatprep.subr.mxu0 0.0
  %353 = vmatpush2.msra.mxu0 0.0
  %354 = vmatprep.subr.mxu0 0.0
  %355 = vmatpush2.msra.mxu0 0.0
  %356 = vmatprep.subr.mxu0 0.0
  %357 = vmatpush2.msra.mxu0 0.0
  %358 = vmatprep.subr.mxu0 0.0
  %359 = vmatpush2.msra.mxu0 0.0
  %360 = vmatprep.subr.mxu0 0.0
  %361 = vmatpush2.msra.mxu0 0.0
  %362 = vmatprep.subr.mxu0 0.0
  %363 = vmatpush2.msra.mxu0 0.0
  %364 = vmatprep.subr.mxu0 0.0
  %365 = vmatpush2.msra.mxu0 0.0
  %366 = vmatprep.subr.mxu0 0.0
  %367 = vmatpush2.msra.mxu0 0.0
  %368 = vmatprep.subr.mxu0 0.0
  %369 = vmatpush2.msra.mxu0 0.0
  %370 = vmatprep.subr.mxu0 0.0
  %371 = vmatpush2.msra.mxu0 0.0
  %372 = vmatprep.subr.mxu0 0.0
  %373 = vmatpush2.msra.mxu0 0.0
  %374 = vmatprep.subr.mxu0 0.0
  %375 = vmatpush2.msra.mxu0 0.0
  %376 = vmatprep.subr.mxu0 0.0
  %377 = vmatpush2.msra.mxu0 0.0
  %378 = vmatprep.subr.mxu0 0.0
  %379 = vmatpush2.msra.mxu0 0.0
  %380 = vmatprep.subr.mxu0 0.0
  %381 = vmatpush2.msra.mxu0 0.0
  %382 = vmatprep.subr.mxu0 0.0
  %383 = vmatpush2.msra.mxu0 0.0
  %384 = vmatprep.mubr.f32.mxu0 0.0
  %385 = vmatmul.mubr.f32.gmra.mxu0 %v315
  %v386 = vpop.f32.mrf.mxu0
  %v387 = vadd.f32 0.0, %v386
  %v388 = vpop.f32.mrf.mxu0
  %389 = vmatprep.mubr.f32.mxu0 0.0
  %390 = vmatmul.mubr.f32.gmra.mxu0 %v318
  %v391 = vpop.f32.mrf.mxu0
  %v392 = vadd.f32 0.0, %v391
  %v393 = vpop.f32.mrf.mxu0
  %394 = vdwg.mxu0
  %395 = vset.pattern.permute.xlu0 3
  %396 = vperm.xlu0 %395, %v230
  %v397 = vpop.permute.xlu0 %396
  %399 = vset.pattern.permute.xlu0 3
  %400 = vperm.xlu0 %399, %v235
  %v401 = vpop.permute.xlu0 %400
  %v403 = vlaneseq
  %v404 = vshrl.u32 %v403, 7
  %v405 = vsub.s32 2, %v404
  %v406 = vrot.slane %v254, %v405
  %v407 = vadd.f32 %v397, %v406
  %v408 = vadd.f32 %v401, %v406
  %v409 = vmul.f32 %v407, 0.2
  %v410 = vmul.f32 %v408, 0.2
  %v411 = vmax.f32 %v407, %v409
  %v412 = vmax.f32 %v408, %v410
  %v413 = vadd.f32 %v411, %v59
  %v414 = vadd.f32 %v412, %v60
  %v415 = vsel %vm70, %v413, -inf
  %416 = vmax.xlane.f32.xlu0 %v415
  %v417 = vpop.xlane.xlu0 %416
  %v418 = vsel %vm70, %v414, -inf
  %419 = vmax.xlane.f32.xlu0 %v418
  %v420 = vpop.xlane.xlu0 %419
  %v421 = vsub.f32 %v413, %v417
  %v422 = vsub.f32 %v414, %v420
  %v423 = vmul.f32 %v421, 1.442695
  %v424 = vpow.pop %v423
  %v425 = vmul.f32 %v422, 1.442695
  %v426 = vpow.pop %v425
  %v427 = vsel %vm70, %v424, 0.0
  %428 = vadd.xlane.f32.xlu0 %v427
  %v429 = vpop.xlane.xlu0 %428
  %v430 = vsel %vm70, %v426, 0.0
  %431 = vadd.xlane.f32.xlu0 %v430
  %v432 = vpop.xlane.xlu0 %431
  %v433 = vrcp.pop %v429
  %v434 = vrcp.pop %v432
  %v435 = vmul.f32 %v424, %v433
  %v436 = vmul.f32 %v426, %v434
  %437 = vrot.lane.b32.xlu0 %v144, 120
  %v438 = vpop.permute.xlu0 %437
  %439 = vrot.lane.b32.xlu0 %v149, 120
  %v440 = vpop.permute.xlu0 %439
  %v444 = vsel %vm70, %v435, 0
  %v447 = vsel %vm70, %v436, 0
  %449 = vmatprep.subr.mxu0 0.0
  %450 = vmatpush1.msra.mxu0 0.0
  %451 = vmatprep.subr.mxu0 0.0
  %452 = vmatpush1.msra.mxu0 0.0
  %453 = vmatprep.subr.mxu0 0.0
  %454 = vmatpush1.msra.mxu0 0.0
  %455 = vmatprep.subr.mxu0 0.0
  %456 = vmatpush1.msra.mxu0 0.0
  %457 = vmatprep.subr.mxu0 0.0
  %458 = vmatpush1.msra.mxu0 0.0
  %459 = vmatprep.subr.mxu0 0.0
  %460 = vmatpush1.msra.mxu0 0.0
  %461 = vmatprep.subr.mxu0 0.0
  %462 = vmatpush1.msra.mxu0 0.0
  %463 = vmatprep.subr.mxu0 0.0
  %464 = vmatpush1.msra.mxu0 0.0
  %465 = vmatprep.subr.mxu0 0.0
  %466 = vmatpush1.msra.mxu0 0.0
  %467 = vmatprep.subr.mxu0 0.0
  %468 = vmatpush1.msra.mxu0 0.0
  %469 = vmatprep.subr.mxu0 0.0
  %470 = vmatpush1.msra.mxu0 0.0
  %471 = vmatprep.subr.mxu0 0.0
  %472 = vmatpush1.msra.mxu0 0.0
  %473 = vmatprep.subr.mxu0 0.0
  %474 = vmatpush1.msra.mxu0 0.0
  %475 = vmatprep.subr.mxu0 0.0
  %476 = vmatpush1.msra.mxu0 0.0
  %477 = vmatprep.subr.mxu0 0.0
  %478 = vmatpush1.msra.mxu0 %v440
  %479 = vmatprep.subr.mxu0 0.0
  %480 = vmatpush1.msra.mxu0 %v438
  %481 = vmatprep.subr.mxu0 0.0
  %482 = vmatpush2.msra.mxu0 0.0
  %483 = vmatprep.subr.mxu0 0.0
  %484 = vmatpush2.msra.mxu0 0.0
  %485 = vmatprep.subr.mxu0 0.0
  %486 = vmatpush2.msra.mxu0 0.0
  %487 = vmatprep.subr.mxu0 0.0
  %488 = vmatpush2.msra.mxu0 0.0
  %489 = vmatprep.subr.mxu0 0.0
  %490 = vmatpush2.msra.mxu0 0.0
  %491 = vmatprep.subr.mxu0 0.0
  %492 = vmatpush2.msra.mxu0 0.0
  %493 = vmatprep.subr.mxu0 0.0
  %494 = vmatpush2.msra.mxu0 0.0
  %495 = vmatprep.subr.mxu0 0.0
  %496 = vmatpush2.msra.mxu0 0.0
  %497 = vmatprep.subr.mxu0 0.0
  %498 = vmatpush2.msra.mxu0 0.0
  %499 = vmatprep.subr.mxu0 0.0
  %500 = vmatpush2.msra.mxu0 0.0
  %501 = vmatprep.subr.mxu0 0.0
  %502 = vmatpush2.msra.mxu0 0.0
  %503 = vmatprep.subr.mxu0 0.0
  %504 = vmatpush2.msra.mxu0 0.0
  %505 = vmatprep.subr.mxu0 0.0
  %506 = vmatpush2.msra.mxu0 0.0
  %507 = vmatprep.subr.mxu0 0.0
  %508 = vmatpush2.msra.mxu0 0.0
  %509 = vmatprep.subr.mxu0 0.0
  %510 = vmatpush2.msra.mxu0 0.0
  %511 = vmatprep.subr.mxu0 0.0
  %512 = vmatpush2.msra.mxu0 0.0
  %513 = vmatprep.mubr.f32.mxu0 0.0
  %514 = vmatmul.mubr.f32.gmra.mxu0 %v444
  %v515 = vpop.f32.mrf.mxu0
  %v516 = vadd.f32 0.0, %v515
  %v517 = vpop.f32.mrf.mxu0
  %518 = vmatprep.mubr.f32.mxu0 0.0
  %519 = vmatmul.mubr.f32.gmra.mxu0 %v447
  %v520 = vpop.f32.mrf.mxu0
  %v521 = vadd.f32 0.0, %v520
  %v522 = vpop.f32.mrf.mxu0
  %523 = vdwg.mxu0
  %526 = vrot.lane.b32.xlu0 %v516, 8
  %v527 = vpop.permute.xlu0 %526
  %528 = vrot.lane.b32.xlu0 %v521, 8
  %v529 = vpop.permute.xlu0 %528
  %vm532 = vcmask 64512
  %v533 = vsel %vm532, %v387, %v527
  %v534 = vsel %vm532, %v392, %v529
  %v535 = vld [vmem:[%s4] sm:$0x1]
  %v537 = vlaneseq
  %v538 = vshrl.u32 %v537, 7
  %v539 = vsub.s32 0, %v538
  %v540 = vrot.slane %v535, %v539
  %v542 = vadd.f32 %v533, %v540
  %v543 = vadd.f32 %v534, %v540
  %vm544 = vcmp.gt.f32.partialorder %v542, 0.0
  %vm545 = vcmp.gt.f32.partialorder %v543, 0.0
  %v546 = vmin.f32 %v542, 0.0
  %v547 = vmin.f32 %v543, 0.0
  %v548 = vmul.f32 %v546, 1.442695
  %v549 = vpow.pop %v548
  %v550 = vmul.f32 %v547, 1.442695
  %v551 = vpow.pop %v550
  %v552 = vsub.f32 %v549, 1.0
  %v553 = vsub.f32 %v551, 1.0
  %v554 = vsel %vm544, %v542, %v552
  %v555 = vsel %vm545, %v543, %v553
  %556 = vset.pattern.permute.xlu0 5
  %557 = vperm.xlu0 %556, %v230
  %v558 = vpop.permute.xlu0 %557
  %560 = vset.pattern.permute.xlu0 5
  %561 = vperm.xlu0 %560, %v235
  %v562 = vpop.permute.xlu0 %561
  %v564 = vlaneseq
  %v565 = vshrl.u32 %v564, 7
  %v566 = vsub.s32 4, %v565
  %v567 = vrot.slane %v254, %v566
  %v568 = vadd.f32 %v558, %v567
  %v569 = vadd.f32 %v562, %v567
  %v570 = vmul.f32 %v568, 0.2
  %v571 = vmul.f32 %v569, 0.2
  %v572 = vmax.f32 %v568, %v570
  %v573 = vmax.f32 %v569, %v571
  %v574 = vadd.f32 %v572, %v66
  %v575 = vadd.f32 %v573, %v67
  %v576 = vsel %vm70, %v574, -inf
  %577 = vmax.xlane.f32.xlu0 %v576
  %v578 = vpop.xlane.xlu0 %577
  %v579 = vsel %vm70, %v575, -inf
  %580 = vmax.xlane.f32.xlu0 %v579
  %v581 = vpop.xlane.xlu0 %580
  %v582 = vsub.f32 %v574, %v578
  %v583 = vsub.f32 %v575, %v581
  %v584 = vmul.f32 %v582, 1.442695
  %v585 = vpow.pop %v584
  %v586 = vmul.f32 %v583, 1.442695
  %v587 = vpow.pop %v586
  %v588 = vsel %vm70, %v585, 0.0
  %589 = vadd.xlane.f32.xlu0 %v588
  %v590 = vpop.xlane.xlu0 %589
  %v591 = vsel %vm70, %v587, 0.0
  %592 = vadd.xlane.f32.xlu0 %v591
  %v593 = vpop.xlane.xlu0 %592
  %v594 = vrcp.pop %v590
  %v595 = vrcp.pop %v593
  %v596 = vmul.f32 %v585, %v594
  %v597 = vmul.f32 %v587, %v595
  %598 = vrot.lane.b32.xlu0 %v144, 112
  %v599 = vpop.permute.xlu0 %598
  %600 = vrot.lane.b32.xlu0 %v149, 112
  %v601 = vpop.permute.xlu0 %600
  %v605 = vsel %vm70, %v596, 0
  %v608 = vsel %vm70, %v597, 0
  %610 = vmatprep.subr.mxu0 0.0
  %611 = vmatpush1.msra.mxu0 0.0
  %612 = vmatprep.subr.mxu0 0.0
  %613 = vmatpush1.msra.mxu0 0.0
  %614 = vmatprep.subr.mxu0 0.0
  %615 = vmatpush1.msra.mxu0 0.0
  %616 = vmatprep.subr.mxu0 0.0
  %617 = vmatpush1.msra.mxu0 0.0
  %618 = vmatprep.subr.mxu0 0.0
  %619 = vmatpush1.msra.mxu0 0.0
  %620 = vmatprep.subr.mxu0 0.0
  %621 = vmatpush1.msra.mxu0 0.0
  %622 = vmatprep.subr.mxu0 0.0
  %623 = vmatpush1.msra.mxu0 0.0
  %624 = vmatprep.subr.mxu0 0.0
  %625 = vmatpush1.msra.mxu0 0.0
  %626 = vmatprep.subr.mxu0 0.0
  %627 = vmatpush1.msra.mxu0 0.0
  %628 = vmatprep.subr.mxu0 0.0
  %629 = vmatpush1.msra.mxu0 0.0
  %630 = vmatprep.subr.mxu0 0.0
  %631 = vmatpush1.msra.mxu0 0.0
  %632 = vmatprep.subr.mxu0 0.0
  %633 = vmatpush1.msra.mxu0 0.0
  %634 = vmatprep.subr.mxu0 0.0
  %635 = vmatpush1.msra.mxu0 0.0
  %636 = vmatprep.subr.mxu0 0.0
  %637 = vmatpush1.msra.mxu0 0.0
  %638 = vmatprep.subr.mxu0 0.0
  %639 = vmatpush1.msra.mxu0 %v601
  %640 = vmatprep.subr.mxu0 0.0
  %641 = vmatpush1.msra.mxu0 %v599
  %642 = vmatprep.subr.mxu0 0.0
  %643 = vmatpush2.msra.mxu0 0.0
  %644 = vmatprep.subr.mxu0 0.0
  %645 = vmatpush2.msra.mxu0 0.0
  %646 = vmatprep.subr.mxu0 0.0
  %647 = vmatpush2.msra.mxu0 0.0
  %648 = vmatprep.subr.mxu0 0.0
  %649 = vmatpush2.msra.mxu0 0.0
  %650 = vmatprep.subr.mxu0 0.0
  %651 = vmatpush2.msra.mxu0 0.0
  %652 = vmatprep.subr.mxu0 0.0
  %653 = vmatpush2.msra.mxu0 0.0
  %654 = vmatprep.subr.mxu0 0.0
  %655 = vmatpush2.msra.mxu0 0.0
  %656 = vmatprep.subr.mxu0 0.0
  %657 = vmatpush2.msra.mxu0 0.0
  %658 = vmatprep.subr.mxu0 0.0
  %659 = vmatpush2.msra.mxu0 0.0
  %660 = vmatprep.subr.mxu0 0.0
  %661 = vmatpush2.msra.mxu0 0.0
  %662 = vmatprep.subr.mxu0 0.0
  %663 = vmatpush2.msra.mxu0 0.0
  %664 = vmatprep.subr.mxu0 0.0
  %665 = vmatpush2.msra.mxu0 0.0
  %666 = vmatprep.subr.mxu0 0.0
  %667 = vmatpush2.msra.mxu0 0.0
  %668 = vmatprep.subr.mxu0 0.0
  %669 = vmatpush2.msra.mxu0 0.0
  %670 = vmatprep.subr.mxu0 0.0
  %671 = vmatpush2.msra.mxu0 0.0
  %672 = vmatprep.subr.mxu0 0.0
  %673 = vmatpush2.msra.mxu0 0.0
  %674 = vmatprep.mubr.f32.mxu0 0.0
  %675 = vmatmul.mubr.f32.gmra.mxu0 %v605
  %v676 = vpop.f32.mrf.mxu0
  %v677 = vadd.f32 0.0, %v676
  %v678 = vpop.f32.mrf.mxu0
  %679 = vmatprep.mubr.f32.mxu0 0.0
  %680 = vmatmul.mubr.f32.gmra.mxu0 %v608
  %v681 = vpop.f32.mrf.mxu0
  %v682 = vadd.f32 0.0, %v681
  %v683 = vpop.f32.mrf.mxu0
  %684 = vdwg.mxu0
  %685 = vset.pattern.permute.xlu0 7
  %686 = vperm.xlu0 %685, %v230
  %v687 = vpop.permute.xlu0 %686
  %689 = vset.pattern.permute.xlu0 7
  %690 = vperm.xlu0 %689, %v235
  %v691 = vpop.permute.xlu0 %690
  %v693 = vlaneseq
  %v694 = vshrl.u32 %v693, 7
  %v695 = vsub.s32 6, %v694
  %v696 = vrot.slane %v254, %v695
  %v697 = vadd.f32 %v687, %v696
  %v698 = vadd.f32 %v691, %v696
  %v699 = vmul.f32 %v697, 0.2
  %v700 = vmul.f32 %v698, 0.2
  %v701 = vmax.f32 %v697, %v699
  %v702 = vmax.f32 %v698, %v700
  %v703 = vadd.f32 %v701, %v66
  %v704 = vadd.f32 %v702, %v67
  %v705 = vsel %vm70, %v703, -inf
  %706 = vmax.xlane.f32.xlu0 %v705
  %v707 = vpop.xlane.xlu0 %706
  %v708 = vsel %vm70, %v704, -inf
  %709 = vmax.xlane.f32.xlu0 %v708
  %v710 = vpop.xlane.xlu0 %709
  %v711 = vsub.f32 %v703, %v707
  %v712 = vsub.f32 %v704, %v710
  %v713 = vmul.f32 %v711, 1.442695
  %v714 = vpow.pop %v713
  %v715 = vmul.f32 %v712, 1.442695
  %v716 = vpow.pop %v715
  %v717 = vsel %vm70, %v714, 0.0
  %718 = vadd.xlane.f32.xlu0 %v717
  %v719 = vpop.xlane.xlu0 %718
  %v720 = vsel %vm70, %v716, 0.0
  %721 = vadd.xlane.f32.xlu0 %v720
  %v722 = vpop.xlane.xlu0 %721
  %v723 = vrcp.pop %v719
  %v724 = vrcp.pop %v722
  %v725 = vmul.f32 %v714, %v723
  %v726 = vmul.f32 %v716, %v724
  %727 = vrot.lane.b32.xlu0 %v144, 104
  %v728 = vpop.permute.xlu0 %727
  %729 = vrot.lane.b32.xlu0 %v149, 104
  %v730 = vpop.permute.xlu0 %729
  %v734 = vsel %vm70, %v725, 0
  %v737 = vsel %vm70, %v726, 0
  %739 = vmatprep.subr.mxu0 0.0
  %740 = vmatpush1.msra.mxu0 0.0
  %741 = vmatprep.subr.mxu0 0.0
  %742 = vmatpush1.msra.mxu0 0.0
  %743 = vmatprep.subr.mxu0 0.0
  %744 = vmatpush1.msra.mxu0 0.0
  %745 = vmatprep.subr.mxu0 0.0
  %746 = vmatpush1.msra.mxu0 0.0
  %747 = vmatprep.subr.mxu0 0.0
  %748 = vmatpush1.msra.mxu0 0.0
  %749 = vmatprep.subr.mxu0 0.0
  %750 = vmatpush1.msra.mxu0 0.0
  %751 = vmatprep.subr.mxu0 0.0
  %752 = vmatpush1.msra.mxu0 0.0
  %753 = vmatprep.subr.mxu0 0.0
  %754 = vmatpush1.msra.mxu0 0.0
  %755 = vmatprep.subr.mxu0 0.0
  %756 = vmatpush1.msra.mxu0 0.0
  %757 = vmatprep.subr.mxu0 0.0
  %758 = vmatpush1.msra.mxu0 0.0
  %759 = vmatprep.subr.mxu0 0.0
  %760 = vmatpush1.msra.mxu0 0.0
  %761 = vmatprep.subr.mxu0 0.0
  %762 = vmatpush1.msra.mxu0 0.0
  %763 = vmatprep.subr.mxu0 0.0
  %764 = vmatpush1.msra.mxu0 0.0
  %765 = vmatprep.subr.mxu0 0.0
  %766 = vmatpush1.msra.mxu0 0.0
  %767 = vmatprep.subr.mxu0 0.0
  %768 = vmatpush1.msra.mxu0 %v730
  %769 = vmatprep.subr.mxu0 0.0
  %770 = vmatpush1.msra.mxu0 %v728
  %771 = vmatprep.subr.mxu0 0.0
  %772 = vmatpush2.msra.mxu0 0.0
  %773 = vmatprep.subr.mxu0 0.0
  %774 = vmatpush2.msra.mxu0 0.0
  %775 = vmatprep.subr.mxu0 0.0
  %776 = vmatpush2.msra.mxu0 0.0
  %777 = vmatprep.subr.mxu0 0.0
  %778 = vmatpush2.msra.mxu0 0.0
  %779 = vmatprep.subr.mxu0 0.0
  %780 = vmatpush2.msra.mxu0 0.0
  %781 = vmatprep.subr.mxu0 0.0
  %782 = vmatpush2.msra.mxu0 0.0
  %783 = vmatprep.subr.mxu0 0.0
  %784 = vmatpush2.msra.mxu0 0.0
  %785 = vmatprep.subr.mxu0 0.0
  %786 = vmatpush2.msra.mxu0 0.0
  %787 = vmatprep.subr.mxu0 0.0
  %788 = vmatpush2.msra.mxu0 0.0
  %789 = vmatprep.subr.mxu0 0.0
  %790 = vmatpush2.msra.mxu0 0.0
  %791 = vmatprep.subr.mxu0 0.0
  %792 = vmatpush2.msra.mxu0 0.0
  %793 = vmatprep.subr.mxu0 0.0
  %794 = vmatpush2.msra.mxu0 0.0
  %795 = vmatprep.subr.mxu0 0.0
  %796 = vmatpush2.msra.mxu0 0.0
  %797 = vmatprep.subr.mxu0 0.0
  %798 = vmatpush2.msra.mxu0 0.0
  %799 = vmatprep.subr.mxu0 0.0
  %800 = vmatpush2.msra.mxu0 0.0
  %801 = vmatprep.subr.mxu0 0.0
  %802 = vmatpush2.msra.mxu0 0.0
  %803 = vmatprep.mubr.f32.mxu0 0.0
  %804 = vmatmul.mubr.f32.gmra.mxu0 %v734
  %v805 = vpop.f32.mrf.mxu0
  %v806 = vadd.f32 0.0, %v805
  %v807 = vpop.f32.mrf.mxu0
  %808 = vmatprep.mubr.f32.mxu0 0.0
  %809 = vmatmul.mubr.f32.gmra.mxu0 %v737
  %v810 = vpop.f32.mrf.mxu0
  %v811 = vadd.f32 0.0, %v810
  %v812 = vpop.f32.mrf.mxu0
  %813 = vdwg.mxu0
  %816 = vrot.lane.b32.xlu0 %v806, 8
  %v817 = vpop.permute.xlu0 %816
  %818 = vrot.lane.b32.xlu0 %v811, 8
  %v819 = vpop.permute.xlu0 %818
  %v822 = vsel %vm532, %v677, %v817
  %v823 = vsel %vm532, %v682, %v819
  %s824 = scalar_lea.vmem %s4, 1
  %v825 = vld [vmem:[%s824] sm:$0x1]
  %v827 = vlaneseq
  %v828 = vshrl.u32 %v827, 7
  %v829 = vsub.s32 0, %v828
  %v830 = vrot.slane %v825, %v829
  %v832 = vadd.f32 %v822, %v830
  %v833 = vadd.f32 %v823, %v830
  %vm834 = vcmp.gt.f32.partialorder %v832, 0.0
  %vm835 = vcmp.gt.f32.partialorder %v833, 0.0
  %v836 = vmin.f32 %v832, 0.0
  %v837 = vmin.f32 %v833, 0.0
  %v838 = vmul.f32 %v836, 1.442695
  %v839 = vpow.pop %v838
  %v840 = vmul.f32 %v837, 1.442695
  %v841 = vpow.pop %v840
  %v842 = vsub.f32 %v839, 1.0
  %v843 = vsub.f32 %v841, 1.0
  %v844 = vsel %vm834, %v832, %v842
  %v845 = vsel %vm835, %v833, %v843
  %v846 = vld [vmem:[%s5] sm:$0xff]
  %v847 = vld [vmem:[%s5 + $0x8] sm:$0xff]
  %v848 = vld [vmem:[%s6] sm:$0x1]
  %v850 = vlaneseq
  %v851 = vshrl.u32 %v850, 7
  %v852 = vsub.s32 0, %v851
  %v853 = vrot.slane %v848, %v852
  %v856 = vsel %vm70, %v554, 0
  %v859 = vsel %vm70, %v555, 0
  %v862 = vsel %vm70, %v844, 0
  %v865 = vsel %vm70, %v845, 0
  %867 = vmatprep.subr.mxu0 0.0
  %868 = vmatpush1.msra.mxu0 0.0
  %869 = vmatprep.subr.mxu0 0.0
  %870 = vmatpush1.msra.mxu0 0.0
  %871 = vmatprep.subr.mxu0 0.0
  %872 = vmatpush1.msra.mxu0 0.0
  %873 = vmatprep.subr.mxu0 0.0
  %874 = vmatpush1.msra.mxu0 0.0
  %875 = vmatprep.subr.mxu0 0.0
  %876 = vmatpush1.msra.mxu0 0.0
  %877 = vmatprep.subr.mxu0 0.0
  %878 = vmatpush1.msra.mxu0 0.0
  %879 = vmatprep.subr.mxu0 0.0
  %880 = vmatpush1.msra.mxu0 0.0
  %881 = vmatprep.subr.mxu0 0.0
  %882 = vmatpush1.msra.mxu0 0.0
  %883 = vmatprep.subr.mxu0 0.0
  %884 = vmatpush1.msra.mxu0 0.0
  %885 = vmatprep.subr.mxu0 0.0
  %886 = vmatpush1.msra.mxu0 0.0
  %887 = vmatprep.subr.mxu0 0.0
  %888 = vmatpush1.msra.mxu0 0.0
  %889 = vmatprep.subr.mxu0 0.0
  %890 = vmatpush1.msra.mxu0 0.0
  %891 = vmatprep.subr.mxu0 0.0
  %892 = vmatpush1.msra.mxu0 0.0
  %893 = vmatprep.subr.mxu0 0.0
  %894 = vmatpush1.msra.mxu0 0.0
  %895 = vmatprep.subr.mxu0 0.0
  %896 = vmatpush1.msra.mxu0 %v847
  %897 = vmatprep.subr.mxu0 0.0
  %898 = vmatpush1.msra.mxu0 %v846
  %899 = vmatprep.subr.mxu0 0.0
  %900 = vmatpush2.msra.mxu0 0.0
  %901 = vmatprep.subr.mxu0 0.0
  %902 = vmatpush2.msra.mxu0 0.0
  %903 = vmatprep.subr.mxu0 0.0
  %904 = vmatpush2.msra.mxu0 0.0
  %905 = vmatprep.subr.mxu0 0.0
  %906 = vmatpush2.msra.mxu0 0.0
  %907 = vmatprep.subr.mxu0 0.0
  %908 = vmatpush2.msra.mxu0 0.0
  %909 = vmatprep.subr.mxu0 0.0
  %910 = vmatpush2.msra.mxu0 0.0
  %911 = vmatprep.subr.mxu0 0.0
  %912 = vmatpush2.msra.mxu0 0.0
  %913 = vmatprep.subr.mxu0 0.0
  %914 = vmatpush2.msra.mxu0 0.0
  %915 = vmatprep.subr.mxu0 0.0
  %916 = vmatpush2.msra.mxu0 0.0
  %917 = vmatprep.subr.mxu0 0.0
  %918 = vmatpush2.msra.mxu0 0.0
  %919 = vmatprep.subr.mxu0 0.0
  %920 = vmatpush2.msra.mxu0 0.0
  %921 = vmatprep.subr.mxu0 0.0
  %922 = vmatpush2.msra.mxu0 0.0
  %923 = vmatprep.subr.mxu0 0.0
  %924 = vmatpush2.msra.mxu0 0.0
  %925 = vmatprep.subr.mxu0 0.0
  %926 = vmatpush2.msra.mxu0 0.0
  %927 = vmatprep.subr.mxu0 0.0
  %928 = vmatpush2.msra.mxu0 0.0
  %929 = vmatprep.subr.mxu0 0.0
  %930 = vmatpush2.msra.mxu0 0.0
  %931 = vmatprep.mubr.f32.mxu0 0.0
  %932 = vmatmul.mubr.f32.gmra.mxu0 %v856
  %v933 = vpop.f32.mrf.mxu0
  %v934 = vadd.f32 %v853, %v933
  %v935 = vpop.f32.mrf.mxu0
  %936 = vmatprep.mubr.f32.mxu0 0.0
  %937 = vmatmul.mubr.f32.gmra.mxu0 %v859
  %v938 = vpop.f32.mrf.mxu0
  %v939 = vadd.f32 %v853, %v938
  %v940 = vpop.f32.mrf.mxu0
  %941 = vmatprep.mubr.f32.mxu0 0.0
  %942 = vmatmul.mubr.f32.gmra.mxu0 %v862
  %v943 = vpop.f32.mrf.mxu0
  %v944 = vadd.f32 %v853, %v943
  %v945 = vpop.f32.mrf.mxu0
  %946 = vmatprep.mubr.f32.mxu0 0.0
  %947 = vmatmul.mubr.f32.gmra.mxu0 %v865
  %v948 = vpop.f32.mrf.mxu0
  %v949 = vadd.f32 %v853, %v948
  %v950 = vpop.f32.mrf.mxu0
  %951 = vdwg.mxu0
  %v952 = vtanh.pop %v934
  %v953 = vtanh.pop %v939
  %v954 = vtanh.pop %v944
  %v955 = vtanh.pop %v949
  %v956 = vld [vmem:[%s7] sm:$0xff]
  %v957 = vld [vmem:[%s7 + $0x8] sm:$0xff]
  %v958 = vld [vmem:[%s7 + $0x10] sm:$0xff]
  %v959 = vld [vmem:[%s7 + $0x18] sm:$0xff]
  %v960 = vld [vmem:[%s7 + $0x20] sm:$0xff]
  %v961 = vld [vmem:[%s7 + $0x28] sm:$0xff]
  %v962 = vld [vmem:[%s7 + $0x30] sm:$0xff]
  %v963 = vld [vmem:[%s7 + $0x38] sm:$0xff]
  %v964 = vld [vmem:[%s7 + $0x40] sm:$0xff]
  %v965 = vld [vmem:[%s7 + $0x48] sm:$0xff]
  %v966 = vld [vmem:[%s7 + $0x50] sm:$0xff]
  %v967 = vld [vmem:[%s7 + $0x58] sm:$0xff]
  %v968 = vld [vmem:[%s7 + $0x60] sm:$0xff]
  %v969 = vld [vmem:[%s7 + $0x68] sm:$0xff]
  %v970 = vld [vmem:[%s7 + $0x70] sm:$0xff]
  %v971 = vld [vmem:[%s7 + $0x78] sm:$0xff]
  %972 = vmatprep.subr.mxu0 0.0
  %973 = vmatpush1.msra.mxu0 %v971
  %974 = vmatprep.subr.mxu0 0.0
  %975 = vmatpush1.msra.mxu0 %v970
  %976 = vmatprep.subr.mxu0 0.0
  %977 = vmatpush1.msra.mxu0 %v969
  %978 = vmatprep.subr.mxu0 0.0
  %979 = vmatpush1.msra.mxu0 %v968
  %980 = vmatprep.subr.mxu0 0.0
  %981 = vmatpush1.msra.mxu0 %v967
  %982 = vmatprep.subr.mxu0 0.0
  %983 = vmatpush1.msra.mxu0 %v966
  %984 = vmatprep.subr.mxu0 0.0
  %985 = vmatpush1.msra.mxu0 %v965
  %986 = vmatprep.subr.mxu0 0.0
  %987 = vmatpush1.msra.mxu0 %v964
  %988 = vmatprep.subr.mxu0 0.0
  %989 = vmatpush1.msra.mxu0 %v963
  %990 = vmatprep.subr.mxu0 0.0
  %991 = vmatpush1.msra.mxu0 %v962
  %992 = vmatprep.subr.mxu0 0.0
  %993 = vmatpush1.msra.mxu0 %v961
  %994 = vmatprep.subr.mxu0 0.0
  %995 = vmatpush1.msra.mxu0 %v960
  %996 = vmatprep.subr.mxu0 0.0
  %997 = vmatpush1.msra.mxu0 %v959
  %998 = vmatprep.subr.mxu0 0.0
  %999 = vmatpush1.msra.mxu0 %v958
  %1000 = vmatprep.subr.mxu0 0.0
  %1001 = vmatpush1.msra.mxu0 %v957
  %1002 = vmatprep.subr.mxu0 0.0
  %1003 = vmatpush1.msra.mxu0 %v956
  %1004 = vmatprep.subr.mxu0 0.0
  %1005 = vmatpush2.msra.mxu0 0.0
  %1006 = vmatprep.subr.mxu0 0.0
  %1007 = vmatpush2.msra.mxu0 0.0
  %1008 = vmatprep.subr.mxu0 0.0
  %1009 = vmatpush2.msra.mxu0 0.0
  %1010 = vmatprep.subr.mxu0 0.0
  %1011 = vmatpush2.msra.mxu0 0.0
  %1012 = vmatprep.subr.mxu0 0.0
  %1013 = vmatpush2.msra.mxu0 0.0
  %1014 = vmatprep.subr.mxu0 0.0
  %1015 = vmatpush2.msra.mxu0 0.0
  %1016 = vmatprep.subr.mxu0 0.0
  %1017 = vmatpush2.msra.mxu0 0.0
  %1018 = vmatprep.subr.mxu0 0.0
  %1019 = vmatpush2.msra.mxu0 0.0
  %1020 = vmatprep.subr.mxu0 0.0
  %1021 = vmatpush2.msra.mxu0 0.0
  %1022 = vmatprep.subr.mxu0 0.0
  %1023 = vmatpush2.msra.mxu0 0.0
  %1024 = vmatprep.subr.mxu0 0.0
  %1025 = vmatpush2.msra.mxu0 0.0
  %1026 = vmatprep.subr.mxu0 0.0
  %1027 = vmatpush2.msra.mxu0 0.0
  %1028 = vmatprep.subr.mxu0 0.0
  %1029 = vmatpush2.msra.mxu0 0.0
  %1030 = vmatprep.subr.mxu0 0.0
  %1031 = vmatpush2.msra.mxu0 0.0
  %1032 = vmatprep.subr.mxu0 0.0
  %1033 = vmatpush2.msra.mxu0 0.0
  %1034 = vmatprep.subr.mxu0 0.0
  %1035 = vmatpush2.msra.mxu0 0.0
  %1036 = vmatprep.mubr.f32.mxu0 0.0
  %1037 = vmatmul.mubr.f32.gmra.mxu0 %v952
  %v1038 = vpop.f32.mrf.mxu0
  %v1039 = vadd.f32 0.0, %v1038
  %v1040 = vpop.f32.mrf.mxu0
  %1041 = vmatprep.mubr.f32.mxu0 0.0
  %1042 = vmatmul.mubr.f32.gmra.mxu0 %v953
  %v1043 = vpop.f32.mrf.mxu0
  %v1044 = vadd.f32 0.0, %v1043
  %v1045 = vpop.f32.mrf.mxu0
  %1046 = vmatprep.mubr.f32.mxu0 0.0
  %1047 = vmatmul.mubr.f32.gmra.mxu0 %v954
  %v1048 = vpop.f32.mrf.mxu0
  %v1049 = vadd.f32 0.0, %v1048
  %v1050 = vpop.f32.mrf.mxu0
  %1051 = vmatprep.mubr.f32.mxu0 0.0
  %1052 = vmatmul.mubr.f32.gmra.mxu0 %v955
  %v1053 = vpop.f32.mrf.mxu0
  %v1054 = vadd.f32 0.0, %v1053
  %v1055 = vpop.f32.mrf.mxu0
  %1056 = vdwg.mxu0
  %vm1057 = vcmask 7168
  %v1058 = vsel %vm1057, %v1039, 0.0
  %v1059 = vsel %vm1057, %v1044, 0.0
  %v1060 = vadd.f32 %v1058, %v1059
  %1061 = vadd.xlane.f32.xlu0 %v1060
  %v1062 = vpop.xlane.xlu0 %1061
  %v1063 = vrot.slane %v1062, 4
  %v1064 = vadd.f32 %v1062, %v1063
  %v1065 = vrot.slane %v1064, 2
  %v1066 = vadd.f32 %v1064, %v1065
  %v1067 = vrot.slane %v1066, 1
  %v1068 = vadd.f32 %v1066, %v1067
  %s1069 = vtos %v1068
  %v1070 = vstv %s1069
  %v1071 = vmul.f32 %v1070, 0.0625
  %v1072 = vsel %vm1057, %v1049, 0.0
  %v1073 = vsel %vm1057, %v1054, 0.0
  %v1074 = vadd.f32 %v1072, %v1073
  %1075 = vadd.xlane.f32.xlu0 %v1074
  %v1076 = vpop.xlane.xlu0 %1075
  %v1077 = vrot.slane %v1076, 4
  %v1078 = vadd.f32 %v1076, %v1077
  %v1079 = vrot.slane %v1078, 2
  %v1080 = vadd.f32 %v1078, %v1079
  %v1081 = vrot.slane %v1080, 1
  %v1082 = vadd.f32 %v1080, %v1081
  %s1083 = vtos %v1082
  %v1084 = vstv %s1083
  %v1085 = vmul.f32 %v1084, 0.0625
  %v1086 = vmax.f32 %v1071, %v1085
  %v1087 = vsub.f32 %v1071, %v1086
  %v1088 = vmul.f32 %v1087, 1.442695
  %v1089 = vpow.pop %v1088
  %v1090 = vsub.f32 %v1085, %v1086
  %v1091 = vmul.f32 %v1090, 1.442695
  %v1092 = vpow.pop %v1091
  %v1093 = vadd.f32 %v1089, %v1092
  %v1094 = vrcp.pop %v1093
  %v1095 = vmul.f32 %v1089, %v1094
  %v1096 = vmul.f32 %v1092, %v1094
  %v1097 = vmul.f32 %v1095, %v554
  %v1098 = vmul.f32 %v1095, %v555
  %v1099 = vmul.f32 %v1096, %v844
  %v1100 = vmul.f32 %v1096, %v845
  %v1101 = vadd.f32 %v1097, %v1099
  %v1102 = vadd.f32 %v1098, %v1100
  %v1103 = vld [vmem:[%s8] sm:$0xff]
  %v1104 = vld [vmem:[%s8 + $0x8] sm:$0xff]
  %v1106 = vsel %vm70, %v1101, 0
  %v1109 = vsel %vm70, %v1102, 0
  %1111 = vmatprep.subr.mxu0 0.0
  %1112 = vmatpush1.msra.mxu0 0.0
  %1113 = vmatprep.subr.mxu0 0.0
  %1114 = vmatpush1.msra.mxu0 0.0
  %1115 = vmatprep.subr.mxu0 0.0
  %1116 = vmatpush1.msra.mxu0 0.0
  %1117 = vmatprep.subr.mxu0 0.0
  %1118 = vmatpush1.msra.mxu0 0.0
  %1119 = vmatprep.subr.mxu0 0.0
  %1120 = vmatpush1.msra.mxu0 0.0
  %1121 = vmatprep.subr.mxu0 0.0
  %1122 = vmatpush1.msra.mxu0 0.0
  %1123 = vmatprep.subr.mxu0 0.0
  %1124 = vmatpush1.msra.mxu0 0.0
  %1125 = vmatprep.subr.mxu0 0.0
  %1126 = vmatpush1.msra.mxu0 0.0
  %1127 = vmatprep.subr.mxu0 0.0
  %1128 = vmatpush1.msra.mxu0 0.0
  %1129 = vmatprep.subr.mxu0 0.0
  %1130 = vmatpush1.msra.mxu0 0.0
  %1131 = vmatprep.subr.mxu0 0.0
  %1132 = vmatpush1.msra.mxu0 0.0
  %1133 = vmatprep.subr.mxu0 0.0
  %1134 = vmatpush1.msra.mxu0 0.0
  %1135 = vmatprep.subr.mxu0 0.0
  %1136 = vmatpush1.msra.mxu0 0.0
  %1137 = vmatprep.subr.mxu0 0.0
  %1138 = vmatpush1.msra.mxu0 0.0
  %1139 = vmatprep.subr.mxu0 0.0
  %1140 = vmatpush1.msra.mxu0 %v1104
  %1141 = vmatprep.subr.mxu0 0.0
  %1142 = vmatpush1.msra.mxu0 %v1103
  %1143 = vmatprep.subr.mxu0 0.0
  %1144 = vmatpush2.msra.mxu0 0.0
  %1145 = vmatprep.subr.mxu0 0.0
  %1146 = vmatpush2.msra.mxu0 0.0
  %1147 = vmatprep.subr.mxu0 0.0
  %1148 = vmatpush2.msra.mxu0 0.0
  %1149 = vmatprep.subr.mxu0 0.0
  %1150 = vmatpush2.msra.mxu0 0.0
  %1151 = vmatprep.subr.mxu0 0.0
  %1152 = vmatpush2.msra.mxu0 0.0
  %1153 = vmatprep.subr.mxu0 0.0
  %1154 = vmatpush2.msra.mxu0 0.0
  %1155 = vmatprep.subr.mxu0 0.0
  %1156 = vmatpush2.msra.mxu0 0.0
  %1157 = vmatprep.subr.mxu0 0.0
  %1158 = vmatpush2.msra.mxu0 0.0
  %1159 = vmatprep.subr.mxu0 0.0
  %1160 = vmatpush2.msra.mxu0 0.0
  %1161 = vmatprep.subr.mxu0 0.0
  %1162 = vmatpush2.msra.mxu0 0.0
  %1163 = vmatprep.subr.mxu0 0.0
  %1164 = vmatpush2.msra.mxu0 0.0
  %1165 = vmatprep.subr.mxu0 0.0
  %1166 = vmatpush2.msra.mxu0 0.0
  %1167 = vmatprep.subr.mxu0 0.0
  %1168 = vmatpush2.msra.mxu0 0.0
  %1169 = vmatprep.subr.mxu0 0.0
  %1170 = vmatpush2.msra.mxu0 0.0
  %1171 = vmatprep.subr.mxu0 0.0
  %1172 = vmatpush2.msra.mxu0 0.0
  %1173 = vmatprep.subr.mxu0 0.0
  %1174 = vmatpush2.msra.mxu0 0.0
  %1175 = vmatprep.mubr.f32.mxu0 0.0
  %1176 = vmatmul.mubr.f32.gmra.mxu0 %v1106
  %v1177 = vpop.f32.mrf.mxu0
  %v1178 = vadd.f32 0.0, %v1177
  %v1179 = vpop.f32.mrf.mxu0
  %1180 = vmatprep.mubr.f32.mxu0 0.0
  %1181 = vmatmul.mubr.f32.gmra.mxu0 %v1109
  %v1182 = vpop.f32.mrf.mxu0
  %v1183 = vadd.f32 0.0, %v1182
  %v1184 = vpop.f32.mrf.mxu0
  %1185 = vdwg.mxu0
  %v1186 = vld [vmem:[%s9] sm:$0xff]
  %v1187 = vld [vmem:[%s9 + $0x8] sm:$0xff]
  %v1188 = vld [vmem:[%s9 + $0x10] sm:$0xff]
  %v1189 = vld [vmem:[%s9 + $0x18] sm:$0xff]
  %v1191 = vsel %vm156, %v1178, 0
  %v1194 = vsel %vm156, %v1183, 0
  %1196 = vmatprep.subr.mxu0 0.0
  %1197 = vmatpush1.msra.mxu0 0.0
  %1198 = vmatprep.subr.mxu0 0.0
  %1199 = vmatpush1.msra.mxu0 0.0
  %1200 = vmatprep.subr.mxu0 0.0
  %1201 = vmatpush1.msra.mxu0 0.0
  %1202 = vmatprep.subr.mxu0 0.0
  %1203 = vmatpush1.msra.mxu0 0.0
  %1204 = vmatprep.subr.mxu0 0.0
  %1205 = vmatpush1.msra.mxu0 0.0
  %1206 = vmatprep.subr.mxu0 0.0
  %1207 = vmatpush1.msra.mxu0 0.0
  %1208 = vmatprep.subr.mxu0 0.0
  %1209 = vmatpush1.msra.mxu0 0.0
  %1210 = vmatprep.subr.mxu0 0.0
  %1211 = vmatpush1.msra.mxu0 0.0
  %1212 = vmatprep.subr.mxu0 0.0
  %1213 = vmatpush1.msra.mxu0 0.0
  %1214 = vmatprep.subr.mxu0 0.0
  %1215 = vmatpush1.msra.mxu0 0.0
  %1216 = vmatprep.subr.mxu0 0.0
  %1217 = vmatpush1.msra.mxu0 0.0
  %1218 = vmatprep.subr.mxu0 0.0
  %1219 = vmatpush1.msra.mxu0 0.0
  %1220 = vmatprep.subr.mxu0 0.0
  %1221 = vmatpush1.msra.mxu0 %v1189
  %1222 = vmatprep.subr.mxu0 0.0
  %1223 = vmatpush1.msra.mxu0 %v1188
  %1224 = vmatprep.subr.mxu0 0.0
  %1225 = vmatpush1.msra.mxu0 %v1187
  %1226 = vmatprep.subr.mxu0 0.0
  %1227 = vmatpush1.msra.mxu0 %v1186
  %1228 = vmatprep.subr.mxu0 0.0
  %1229 = vmatpush2.msra.mxu0 0.0
  %1230 = vmatprep.subr.mxu0 0.0
  %1231 = vmatpush2.msra.mxu0 0.0
  %1232 = vmatprep.subr.mxu0 0.0
  %1233 = vmatpush2.msra.mxu0 0.0
  %1234 = vmatprep.subr.mxu0 0.0
  %1235 = vmatpush2.msra.mxu0 0.0
  %1236 = vmatprep.subr.mxu0 0.0
  %1237 = vmatpush2.msra.mxu0 0.0
  %1238 = vmatprep.subr.mxu0 0.0
  %1239 = vmatpush2.msra.mxu0 0.0
  %1240 = vmatprep.subr.mxu0 0.0
  %1241 = vmatpush2.msra.mxu0 0.0
  %1242 = vmatprep.subr.mxu0 0.0
  %1243 = vmatpush2.msra.mxu0 0.0
  %1244 = vmatprep.subr.mxu0 0.0
  %1245 = vmatpush2.msra.mxu0 0.0
  %1246 = vmatprep.subr.mxu0 0.0
  %1247 = vmatpush2.msra.mxu0 0.0
  %1248 = vmatprep.subr.mxu0 0.0
  %1249 = vmatpush2.msra.mxu0 0.0
  %1250 = vmatprep.subr.mxu0 0.0
  %1251 = vmatpush2.msra.mxu0 0.0
  %1252 = vmatprep.subr.mxu0 0.0
  %1253 = vmatpush2.msra.mxu0 0.0
  %1254 = vmatprep.subr.mxu0 0.0
  %1255 = vmatpush2.msra.mxu0 0.0
  %1256 = vmatprep.subr.mxu0 0.0
  %1257 = vmatpush2.msra.mxu0 0.0
  %1258 = vmatprep.subr.mxu0 0.0
  %1259 = vmatpush2.msra.mxu0 0.0
  %1260 = vmatprep.mubr.f32.mxu0 0.0
  %1261 = vmatmul.mubr.f32.gmra.mxu0 %v1191
  %v1262 = vpop.f32.mrf.mxu0
  %v1263 = vadd.f32 0.0, %v1262
  %v1264 = vpop.f32.mrf.mxu0
  %1265 = vmatprep.mubr.f32.mxu0 0.0
  %1266 = vmatmul.mubr.f32.gmra.mxu0 %v1194
  %v1267 = vpop.f32.mrf.mxu0
  %v1268 = vadd.f32 0.0, %v1267
  %v1269 = vpop.f32.mrf.mxu0
  %1270 = vdwg.mxu0
  %1271 = vxpose.xlu0.b32.start [1/16] %v1263, 128
  %1272 = vxpose.xlu0.b32.cont [2/16] %v1268, 128
  %1273 = vxpose.xlu0.b32.cont [3/16] 0.0, 128
  %1274 = vxpose.xlu0.b32.cont [4/16] 0.0, 128
  %1275 = vxpose.xlu0.b32.cont [5/16] 0.0, 128
  %1276 = vxpose.xlu0.b32.cont [6/16] 0.0, 128
  %1277 = vxpose.xlu0.b32.cont [7/16] 0.0, 128
  %1278 = vxpose.xlu0.b32.cont [8/16] 0.0, 128
  %1279 = vxpose.xlu0.b32.cont [9/16] 0.0, 128
  %1280 = vxpose.xlu0.b32.cont [10/16] 0.0, 128
  %1281 = vxpose.xlu0.b32.cont [11/16] 0.0, 128
  %1282 = vxpose.xlu0.b32.cont [12/16] 0.0, 128
  %1283 = vxpose.xlu0.b32.cont [13/16] 0.0, 128
  %1284 = vxpose.xlu0.b32.cont [14/16] 0.0, 128
  %1285 = vxpose.xlu0.b32.cont [15/16] 0.0, 128
  %1286 = vxpose.xlu0.b32.end [16/16] 0.0, 128
  %v1287 = vpop.trf.xlu0
  %v1288 = vpop.trf.xlu0
  %v1289 = vpop.trf.xlu0
  %v1290 = vpop.trf.xlu0
  %v1291 = vpop.trf.xlu0
  %v1292 = vpop.trf.xlu0
  %v1293 = vpop.trf.xlu0
  %v1294 = vpop.trf.xlu0
  %v1295 = vpop.trf.xlu0
  %v1296 = vpop.trf.xlu0
  %v1297 = vpop.trf.xlu0
  %v1298 = vpop.trf.xlu0
  %v1299 = vpop.trf.xlu0
  %v1300 = vpop.trf.xlu0
  %v1301 = vpop.trf.xlu0
  %v1302 = vpop.trf.xlu0
  %1304 = vset.pattern.permute.xlu0 1
  %1305 = vperm.xlu0 %1304, %v1263
  %v1306 = vpop.permute.xlu0 %1305
  %1309 = vset.pattern.permute.xlu0 1
  %1310 = vperm.xlu0 %1309, %v1268
  %v1311 = vpop.permute.xlu0 %1310
  %v1313 = vlaneseq
  %v1314 = vshrl.u32 %v1313, 7
  %v1315 = vsub.s32 0, %v1314
  %v1316 = vrot.slane %v1287, %v1315
  %v1317 = vadd.f32 %v1306, %v1316
  %v1318 = vadd.f32 %v1311, %v1316
  %v1319 = vmul.f32 %v1317, 0.2
  %v1320 = vmul.f32 %v1318, 0.2
  %v1321 = vmax.f32 %v1317, %v1319
  %v1322 = vmax.f32 %v1318, %v1320
  %v1323 = vadd.f32 %v1321, %v59
  %v1324 = vadd.f32 %v1322, %v60
  %v1325 = vsel %vm70, %v1323, -inf
  %1326 = vmax.xlane.f32.xlu0 %v1325
  %v1327 = vpop.xlane.xlu0 %1326
  %v1328 = vsel %vm70, %v1324, -inf
  %1329 = vmax.xlane.f32.xlu0 %v1328
  %v1330 = vpop.xlane.xlu0 %1329
  %v1331 = vsub.f32 %v1323, %v1327
  %v1332 = vsub.f32 %v1324, %v1330
  %v1333 = vmul.f32 %v1331, 1.442695
  %v1334 = vpow.pop %v1333
  %v1335 = vmul.f32 %v1332, 1.442695
  %v1336 = vpow.pop %v1335
  %v1337 = vsel %vm70, %v1334, 0.0
  %1338 = vadd.xlane.f32.xlu0 %v1337
  %v1339 = vpop.xlane.xlu0 %1338
  %v1340 = vsel %vm70, %v1336, 0.0
  %1341 = vadd.xlane.f32.xlu0 %v1340
  %v1342 = vpop.xlane.xlu0 %1341
  %v1343 = vrcp.pop %v1339
  %v1344 = vrcp.pop %v1342
  %v1345 = vmul.f32 %v1334, %v1343
  %v1346 = vmul.f32 %v1336, %v1344
  %v1348 = vsel %vm70, %v1345, 0
  %v1351 = vsel %vm70, %v1346, 0
  %1353 = vmatprep.subr.mxu0 0.0
  %1354 = vmatpush1.msra.mxu0 0.0
  %1355 = vmatprep.subr.mxu0 0.0
  %1356 = vmatpush1.msra.mxu0 0.0
  %1357 = vmatprep.subr.mxu0 0.0
  %1358 = vmatpush1.msra.mxu0 0.0
  %1359 = vmatprep.subr.mxu0 0.0
  %1360 = vmatpush1.msra.mxu0 0.0
  %1361 = vmatprep.subr.mxu0 0.0
  %1362 = vmatpush1.msra.mxu0 0.0
  %1363 = vmatprep.subr.mxu0 0.0
  %1364 = vmatpush1.msra.mxu0 0.0
  %1365 = vmatprep.subr.mxu0 0.0
  %1366 = vmatpush1.msra.mxu0 0.0
  %1367 = vmatprep.subr.mxu0 0.0
  %1368 = vmatpush1.msra.mxu0 0.0
  %1369 = vmatprep.subr.mxu0 0.0
  %1370 = vmatpush1.msra.mxu0 0.0
  %1371 = vmatprep.subr.mxu0 0.0
  %1372 = vmatpush1.msra.mxu0 0.0
  %1373 = vmatprep.subr.mxu0 0.0
  %1374 = vmatpush1.msra.mxu0 0.0
  %1375 = vmatprep.subr.mxu0 0.0
  %1376 = vmatpush1.msra.mxu0 0.0
  %1377 = vmatprep.subr.mxu0 0.0
  %1378 = vmatpush1.msra.mxu0 0.0
  %1379 = vmatprep.subr.mxu0 0.0
  %1380 = vmatpush1.msra.mxu0 0.0
  %1381 = vmatprep.subr.mxu0 0.0
  %1382 = vmatpush1.msra.mxu0 %v1183
  %1383 = vmatprep.subr.mxu0 0.0
  %1384 = vmatpush1.msra.mxu0 %v1178
  %1385 = vmatprep.subr.mxu0 0.0
  %1386 = vmatpush2.msra.mxu0 0.0
  %1387 = vmatprep.subr.mxu0 0.0
  %1388 = vmatpush2.msra.mxu0 0.0
  %1389 = vmatprep.subr.mxu0 0.0
  %1390 = vmatpush2.msra.mxu0 0.0
  %1391 = vmatprep.subr.mxu0 0.0
  %1392 = vmatpush2.msra.mxu0 0.0
  %1393 = vmatprep.subr.mxu0 0.0
  %1394 = vmatpush2.msra.mxu0 0.0
  %1395 = vmatprep.subr.mxu0 0.0
  %1396 = vmatpush2.msra.mxu0 0.0
  %1397 = vmatprep.subr.mxu0 0.0
  %1398 = vmatpush2.msra.mxu0 0.0
  %1399 = vmatprep.subr.mxu0 0.0
  %1400 = vmatpush2.msra.mxu0 0.0
  %1401 = vmatprep.subr.mxu0 0.0
  %1402 = vmatpush2.msra.mxu0 0.0
  %1403 = vmatprep.subr.mxu0 0.0
  %1404 = vmatpush2.msra.mxu0 0.0
  %1405 = vmatprep.subr.mxu0 0.0
  %1406 = vmatpush2.msra.mxu0 0.0
  %1407 = vmatprep.subr.mxu0 0.0
  %1408 = vmatpush2.msra.mxu0 0.0
  %1409 = vmatprep.subr.mxu0 0.0
  %1410 = vmatpush2.msra.mxu0 0.0
  %1411 = vmatprep.subr.mxu0 0.0
  %1412 = vmatpush2.msra.mxu0 0.0
  %1413 = vmatprep.subr.mxu0 0.0
  %1414 = vmatpush2.msra.mxu0 0.0
  %1415 = vmatprep.subr.mxu0 0.0
  %1416 = vmatpush2.msra.mxu0 0.0
  %1417 = vmatprep.mubr.f32.mxu0 0.0
  %1418 = vmatmul.mubr.f32.gmra.mxu0 %v1348
  %v1419 = vpop.f32.mrf.mxu0
  %v1420 = vadd.f32 0.0, %v1419
  %v1421 = vpop.f32.mrf.mxu0
  %1422 = vmatprep.mubr.f32.mxu0 0.0
  %1423 = vmatmul.mubr.f32.gmra.mxu0 %v1351
  %v1424 = vpop.f32.mrf.mxu0
  %v1425 = vadd.f32 0.0, %v1424
  %v1426 = vpop.f32.mrf.mxu0
  %1427 = vdwg.mxu0
  %1428 = vset.pattern.permute.xlu0 3
  %1429 = vperm.xlu0 %1428, %v1263
  %v1430 = vpop.permute.xlu0 %1429
  %1432 = vset.pattern.permute.xlu0 3
  %1433 = vperm.xlu0 %1432, %v1268
  %v1434 = vpop.permute.xlu0 %1433
  %v1436 = vlaneseq
  %v1437 = vshrl.u32 %v1436, 7
  %v1438 = vsub.s32 2, %v1437
  %v1439 = vrot.slane %v1287, %v1438
  %v1440 = vadd.f32 %v1430, %v1439
  %v1441 = vadd.f32 %v1434, %v1439
  %v1442 = vmul.f32 %v1440, 0.2
  %v1443 = vmul.f32 %v1441, 0.2
  %v1444 = vmax.f32 %v1440, %v1442
  %v1445 = vmax.f32 %v1441, %v1443
  %v1446 = vadd.f32 %v1444, %v59
  %v1447 = vadd.f32 %v1445, %v60
  %v1448 = vsel %vm70, %v1446, -inf
  %1449 = vmax.xlane.f32.xlu0 %v1448
  %v1450 = vpop.xlane.xlu0 %1449
  %v1451 = vsel %vm70, %v1447, -inf
  %1452 = vmax.xlane.f32.xlu0 %v1451
  %v1453 = vpop.xlane.xlu0 %1452
  %v1454 = vsub.f32 %v1446, %v1450
  %v1455 = vsub.f32 %v1447, %v1453
  %v1456 = vmul.f32 %v1454, 1.442695
  %v1457 = vpow.pop %v1456
  %v1458 = vmul.f32 %v1455, 1.442695
  %v1459 = vpow.pop %v1458
  %v1460 = vsel %vm70, %v1457, 0.0
  %1461 = vadd.xlane.f32.xlu0 %v1460
  %v1462 = vpop.xlane.xlu0 %1461
  %v1463 = vsel %vm70, %v1459, 0.0
  %1464 = vadd.xlane.f32.xlu0 %v1463
  %v1465 = vpop.xlane.xlu0 %1464
  %v1466 = vrcp.pop %v1462
  %v1467 = vrcp.pop %v1465
  %v1468 = vmul.f32 %v1457, %v1466
  %v1469 = vmul.f32 %v1459, %v1467
  %1470 = vrot.lane.b32.xlu0 %v1178, 120
  %v1471 = vpop.permute.xlu0 %1470
  %1472 = vrot.lane.b32.xlu0 %v1183, 120
  %v1473 = vpop.permute.xlu0 %1472
  %v1477 = vsel %vm70, %v1468, 0
  %v1480 = vsel %vm70, %v1469, 0
  %1482 = vmatprep.subr.mxu0 0.0
  %1483 = vmatpush1.msra.mxu0 0.0
  %1484 = vmatprep.subr.mxu0 0.0
  %1485 = vmatpush1.msra.mxu0 0.0
  %1486 = vmatprep.subr.mxu0 0.0
  %1487 = vmatpush1.msra.mxu0 0.0
  %1488 = vmatprep.subr.mxu0 0.0
  %1489 = vmatpush1.msra.mxu0 0.0
  %1490 = vmatprep.subr.mxu0 0.0
  %1491 = vmatpush1.msra.mxu0 0.0
  %1492 = vmatprep.subr.mxu0 0.0
  %1493 = vmatpush1.msra.mxu0 0.0
  %1494 = vmatprep.subr.mxu0 0.0
  %1495 = vmatpush1.msra.mxu0 0.0
  %1496 = vmatprep.subr.mxu0 0.0
  %1497 = vmatpush1.msra.mxu0 0.0
  %1498 = vmatprep.subr.mxu0 0.0
  %1499 = vmatpush1.msra.mxu0 0.0
  %1500 = vmatprep.subr.mxu0 0.0
  %1501 = vmatpush1.msra.mxu0 0.0
  %1502 = vmatprep.subr.mxu0 0.0
  %1503 = vmatpush1.msra.mxu0 0.0
  %1504 = vmatprep.subr.mxu0 0.0
  %1505 = vmatpush1.msra.mxu0 0.0
  %1506 = vmatprep.subr.mxu0 0.0
  %1507 = vmatpush1.msra.mxu0 0.0
  %1508 = vmatprep.subr.mxu0 0.0
  %1509 = vmatpush1.msra.mxu0 0.0
  %1510 = vmatprep.subr.mxu0 0.0
  %1511 = vmatpush1.msra.mxu0 %v1473
  %1512 = vmatprep.subr.mxu0 0.0
  %1513 = vmatpush1.msra.mxu0 %v1471
  %1514 = vmatprep.subr.mxu0 0.0
  %1515 = vmatpush2.msra.mxu0 0.0
  %1516 = vmatprep.subr.mxu0 0.0
  %1517 = vmatpush2.msra.mxu0 0.0
  %1518 = vmatprep.subr.mxu0 0.0
  %1519 = vmatpush2.msra.mxu0 0.0
  %1520 = vmatprep.subr.mxu0 0.0
  %1521 = vmatpush2.msra.mxu0 0.0
  %1522 = vmatprep.subr.mxu0 0.0
  %1523 = vmatpush2.msra.mxu0 0.0
  %1524 = vmatprep.subr.mxu0 0.0
  %1525 = vmatpush2.msra.mxu0 0.0
  %1526 = vmatprep.subr.mxu0 0.0
  %1527 = vmatpush2.msra.mxu0 0.0
  %1528 = vmatprep.subr.mxu0 0.0
  %1529 = vmatpush2.msra.mxu0 0.0
  %1530 = vmatprep.subr.mxu0 0.0
  %1531 = vmatpush2.msra.mxu0 0.0
  %1532 = vmatprep.subr.mxu0 0.0
  %1533 = vmatpush2.msra.mxu0 0.0
  %1534 = vmatprep.subr.mxu0 0.0
  %1535 = vmatpush2.msra.mxu0 0.0
  %1536 = vmatprep.subr.mxu0 0.0
  %1537 = vmatpush2.msra.mxu0 0.0
  %1538 = vmatprep.subr.mxu0 0.0
  %1539 = vmatpush2.msra.mxu0 0.0
  %1540 = vmatprep.subr.mxu0 0.0
  %1541 = vmatpush2.msra.mxu0 0.0
  %1542 = vmatprep.subr.mxu0 0.0
  %1543 = vmatpush2.msra.mxu0 0.0
  %1544 = vmatprep.subr.mxu0 0.0
  %1545 = vmatpush2.msra.mxu0 0.0
  %1546 = vmatprep.mubr.f32.mxu0 0.0
  %1547 = vmatmul.mubr.f32.gmra.mxu0 %v1477
  %v1548 = vpop.f32.mrf.mxu0
  %v1549 = vadd.f32 0.0, %v1548
  %v1550 = vpop.f32.mrf.mxu0
  %1551 = vmatprep.mubr.f32.mxu0 0.0
  %1552 = vmatmul.mubr.f32.gmra.mxu0 %v1480
  %v1553 = vpop.f32.mrf.mxu0
  %v1554 = vadd.f32 0.0, %v1553
  %v1555 = vpop.f32.mrf.mxu0
  %1556 = vdwg.mxu0
  %1559 = vrot.lane.b32.xlu0 %v1549, 8
  %v1560 = vpop.permute.xlu0 %1559
  %1561 = vrot.lane.b32.xlu0 %v1554, 8
  %v1562 = vpop.permute.xlu0 %1561
  %v1565 = vsel %vm532, %v1420, %v1560
  %v1566 = vsel %vm532, %v1425, %v1562
  %v1567 = vld [vmem:[%s10] sm:$0x1]
  %v1569 = vlaneseq
  %v1570 = vshrl.u32 %v1569, 7
  %v1571 = vsub.s32 0, %v1570
  %v1572 = vrot.slane %v1567, %v1571
  %v1574 = vadd.f32 %v1565, %v1572
  %v1575 = vadd.f32 %v1566, %v1572
  %vm1576 = vcmp.gt.f32.partialorder %v1574, 0.0
  %vm1577 = vcmp.gt.f32.partialorder %v1575, 0.0
  %v1578 = vmin.f32 %v1574, 0.0
  %v1579 = vmin.f32 %v1575, 0.0
  %v1580 = vmul.f32 %v1578, 1.442695
  %v1581 = vpow.pop %v1580
  %v1582 = vmul.f32 %v1579, 1.442695
  %v1583 = vpow.pop %v1582
  %v1584 = vsub.f32 %v1581, 1.0
  %v1585 = vsub.f32 %v1583, 1.0
  %v1586 = vsel %vm1576, %v1574, %v1584
  %v1587 = vsel %vm1577, %v1575, %v1585
  %1588 = vset.pattern.permute.xlu0 5
  %1589 = vperm.xlu0 %1588, %v1263
  %v1590 = vpop.permute.xlu0 %1589
  %1592 = vset.pattern.permute.xlu0 5
  %1593 = vperm.xlu0 %1592, %v1268
  %v1594 = vpop.permute.xlu0 %1593
  %v1596 = vlaneseq
  %v1597 = vshrl.u32 %v1596, 7
  %v1598 = vsub.s32 4, %v1597
  %v1599 = vrot.slane %v1287, %v1598
  %v1600 = vadd.f32 %v1590, %v1599
  %v1601 = vadd.f32 %v1594, %v1599
  %v1602 = vmul.f32 %v1600, 0.2
  %v1603 = vmul.f32 %v1601, 0.2
  %v1604 = vmax.f32 %v1600, %v1602
  %v1605 = vmax.f32 %v1601, %v1603
  %v1606 = vadd.f32 %v1604, %v66
  %v1607 = vadd.f32 %v1605, %v67
  %v1608 = vsel %vm70, %v1606, -inf
  %1609 = vmax.xlane.f32.xlu0 %v1608
  %v1610 = vpop.xlane.xlu0 %1609
  %v1611 = vsel %vm70, %v1607, -inf
  %1612 = vmax.xlane.f32.xlu0 %v1611
  %v1613 = vpop.xlane.xlu0 %1612
  %v1614 = vsub.f32 %v1606, %v1610
  %v1615 = vsub.f32 %v1607, %v1613
  %v1616 = vmul.f32 %v1614, 1.442695
  %v1617 = vpow.pop %v1616
  %v1618 = vmul.f32 %v1615, 1.442695
  %v1619 = vpow.pop %v1618
  %v1620 = vsel %vm70, %v1617, 0.0
  %1621 = vadd.xlane.f32.xlu0 %v1620
  %v1622 = vpop.xlane.xlu0 %1621
  %v1623 = vsel %vm70, %v1619, 0.0
  %1624 = vadd.xlane.f32.xlu0 %v1623
  %v1625 = vpop.xlane.xlu0 %1624
  %v1626 = vrcp.pop %v1622
  %v1627 = vrcp.pop %v1625
  %v1628 = vmul.f32 %v1617, %v1626
  %v1629 = vmul.f32 %v1619, %v1627
  %1630 = vrot.lane.b32.xlu0 %v1178, 112
  %v1631 = vpop.permute.xlu0 %1630
  %1632 = vrot.lane.b32.xlu0 %v1183, 112
  %v1633 = vpop.permute.xlu0 %1632
  %v1637 = vsel %vm70, %v1628, 0
  %v1640 = vsel %vm70, %v1629, 0
  %1642 = vmatprep.subr.mxu0 0.0
  %1643 = vmatpush1.msra.mxu0 0.0
  %1644 = vmatprep.subr.mxu0 0.0
  %1645 = vmatpush1.msra.mxu0 0.0
  %1646 = vmatprep.subr.mxu0 0.0
  %1647 = vmatpush1.msra.mxu0 0.0
  %1648 = vmatprep.subr.mxu0 0.0
  %1649 = vmatpush1.msra.mxu0 0.0
  %1650 = vmatprep.subr.mxu0 0.0
  %1651 = vmatpush1.msra.mxu0 0.0
  %1652 = vmatprep.subr.mxu0 0.0
  %1653 = vmatpush1.msra.mxu0 0.0
  %1654 = vmatprep.subr.mxu0 0.0
  %1655 = vmatpush1.msra.mxu0 0.0
  %1656 = vmatprep.subr.mxu0 0.0
  %1657 = vmatpush1.msra.mxu0 0.0
  %1658 = vmatprep.subr.mxu0 0.0
  %1659 = vmatpush1.msra.mxu0 0.0
  %1660 = vmatprep.subr.mxu0 0.0
  %1661 = vmatpush1.msra.mxu0 0.0
  %1662 = vmatprep.subr.mxu0 0.0
  %1663 = vmatpush1.msra.mxu0 0.0
  %1664 = vmatprep.subr.mxu0 0.0
  %1665 = vmatpush1.msra.mxu0 0.0
  %1666 = vmatprep.subr.mxu0 0.0
  %1667 = vmatpush1.msra.mxu0 0.0
  %1668 = vmatprep.subr.mxu0 0.0
  %1669 = vmatpush1.msra.mxu0 0.0
  %1670 = vmatprep.subr.mxu0 0.0
  %1671 = vmatpush1.msra.mxu0 %v1633
  %1672 = vmatprep.subr.mxu0 0.0
  %1673 = vmatpush1.msra.mxu0 %v1631
  %1674 = vmatprep.subr.mxu0 0.0
  %1675 = vmatpush2.msra.mxu0 0.0
  %1676 = vmatprep.subr.mxu0 0.0
  %1677 = vmatpush2.msra.mxu0 0.0
  %1678 = vmatprep.subr.mxu0 0.0
  %1679 = vmatpush2.msra.mxu0 0.0
  %1680 = vmatprep.subr.mxu0 0.0
  %1681 = vmatpush2.msra.mxu0 0.0
  %1682 = vmatprep.subr.mxu0 0.0
  %1683 = vmatpush2.msra.mxu0 0.0
  %1684 = vmatprep.subr.mxu0 0.0
  %1685 = vmatpush2.msra.mxu0 0.0
  %1686 = vmatprep.subr.mxu0 0.0
  %1687 = vmatpush2.msra.mxu0 0.0
  %1688 = vmatprep.subr.mxu0 0.0
  %1689 = vmatpush2.msra.mxu0 0.0
  %1690 = vmatprep.subr.mxu0 0.0
  %1691 = vmatpush2.msra.mxu0 0.0
  %1692 = vmatprep.subr.mxu0 0.0
  %1693 = vmatpush2.msra.mxu0 0.0
  %1694 = vmatprep.subr.mxu0 0.0
  %1695 = vmatpush2.msra.mxu0 0.0
  %1696 = vmatprep.subr.mxu0 0.0
  %1697 = vmatpush2.msra.mxu0 0.0
  %1698 = vmatprep.subr.mxu0 0.0
  %1699 = vmatpush2.msra.mxu0 0.0
  %1700 = vmatprep.subr.mxu0 0.0
  %1701 = vmatpush2.msra.mxu0 0.0
  %1702 = vmatprep.subr.mxu0 0.0
  %1703 = vmatpush2.msra.mxu0 0.0
  %1704 = vmatprep.subr.mxu0 0.0
  %1705 = vmatpush2.msra.mxu0 0.0
  %1706 = vmatprep.mubr.f32.mxu0 0.0
  %1707 = vmatmul.mubr.f32.gmra.mxu0 %v1637
  %v1708 = vpop.f32.mrf.mxu0
  %v1709 = vadd.f32 0.0, %v1708
  %v1710 = vpop.f32.mrf.mxu0
  %1711 = vmatprep.mubr.f32.mxu0 0.0
  %1712 = vmatmul.mubr.f32.gmra.mxu0 %v1640
  %v1713 = vpop.f32.mrf.mxu0
  %v1714 = vadd.f32 0.0, %v1713
  %v1715 = vpop.f32.mrf.mxu0
  %1716 = vdwg.mxu0
  %1717 = vset.pattern.permute.xlu0 7
  %1718 = vperm.xlu0 %1717, %v1263
  %v1719 = vpop.permute.xlu0 %1718
  %1721 = vset.pattern.permute.xlu0 7
  %1722 = vperm.xlu0 %1721, %v1268
  %v1723 = vpop.permute.xlu0 %1722
  %v1725 = vlaneseq
  %v1726 = vshrl.u32 %v1725, 7
  %v1727 = vsub.s32 6, %v1726
  %v1728 = vrot.slane %v1287, %v1727
  %v1729 = vadd.f32 %v1719, %v1728
  %v1730 = vadd.f32 %v1723, %v1728
  %v1731 = vmul.f32 %v1729, 0.2
  %v1732 = vmul.f32 %v1730, 0.2
  %v1733 = vmax.f32 %v1729, %v1731
  %v1734 = vmax.f32 %v1730, %v1732
  %v1735 = vadd.f32 %v1733, %v66
  %v1736 = vadd.f32 %v1734, %v67
  %v1737 = vsel %vm70, %v1735, -inf
  %1738 = vmax.xlane.f32.xlu0 %v1737
  %v1739 = vpop.xlane.xlu0 %1738
  %v1740 = vsel %vm70, %v1736, -inf
  %1741 = vmax.xlane.f32.xlu0 %v1740
  %v1742 = vpop.xlane.xlu0 %1741
  %v1743 = vsub.f32 %v1735, %v1739
  %v1744 = vsub.f32 %v1736, %v1742
  %v1745 = vmul.f32 %v1743, 1.442695
  %v1746 = vpow.pop %v1745
  %v1747 = vmul.f32 %v1744, 1.442695
  %v1748 = vpow.pop %v1747
  %v1749 = vsel %vm70, %v1746, 0.0
  %1750 = vadd.xlane.f32.xlu0 %v1749
  %v1751 = vpop.xlane.xlu0 %1750
  %v1752 = vsel %vm70, %v1748, 0.0
  %1753 = vadd.xlane.f32.xlu0 %v1752
  %v1754 = vpop.xlane.xlu0 %1753
  %v1755 = vrcp.pop %v1751
  %v1756 = vrcp.pop %v1754
  %v1757 = vmul.f32 %v1746, %v1755
  %v1758 = vmul.f32 %v1748, %v1756
  %1759 = vrot.lane.b32.xlu0 %v1178, 104
  %v1760 = vpop.permute.xlu0 %1759
  %1761 = vrot.lane.b32.xlu0 %v1183, 104
  %v1762 = vpop.permute.xlu0 %1761
  %v1766 = vsel %vm70, %v1757, 0
  %v1769 = vsel %vm70, %v1758, 0
  %1771 = vmatprep.subr.mxu0 0.0
  %1772 = vmatpush1.msra.mxu0 0.0
  %1773 = vmatprep.subr.mxu0 0.0
  %1774 = vmatpush1.msra.mxu0 0.0
  %1775 = vmatprep.subr.mxu0 0.0
  %1776 = vmatpush1.msra.mxu0 0.0
  %1777 = vmatprep.subr.mxu0 0.0
  %1778 = vmatpush1.msra.mxu0 0.0
  %1779 = vmatprep.subr.mxu0 0.0
  %1780 = vmatpush1.msra.mxu0 0.0
  %1781 = vmatprep.subr.mxu0 0.0
  %1782 = vmatpush1.msra.mxu0 0.0
  %1783 = vmatprep.subr.mxu0 0.0
  %1784 = vmatpush1.msra.mxu0 0.0
  %1785 = vmatprep.subr.mxu0 0.0
  %1786 = vmatpush1.msra.mxu0 0.0
  %1787 = vmatprep.subr.mxu0 0.0
  %1788 = vmatpush1.msra.mxu0 0.0
  %1789 = vmatprep.subr.mxu0 0.0
  %1790 = vmatpush1.msra.mxu0 0.0
  %1791 = vmatprep.subr.mxu0 0.0
  %1792 = vmatpush1.msra.mxu0 0.0
  %1793 = vmatprep.subr.mxu0 0.0
  %1794 = vmatpush1.msra.mxu0 0.0
  %1795 = vmatprep.subr.mxu0 0.0
  %1796 = vmatpush1.msra.mxu0 0.0
  %1797 = vmatprep.subr.mxu0 0.0
  %1798 = vmatpush1.msra.mxu0 0.0
  %1799 = vmatprep.subr.mxu0 0.0
  %1800 = vmatpush1.msra.mxu0 %v1762
  %1801 = vmatprep.subr.mxu0 0.0
  %1802 = vmatpush1.msra.mxu0 %v1760
  %1803 = vmatprep.subr.mxu0 0.0
  %1804 = vmatpush2.msra.mxu0 0.0
  %1805 = vmatprep.subr.mxu0 0.0
  %1806 = vmatpush2.msra.mxu0 0.0
  %1807 = vmatprep.subr.mxu0 0.0
  %1808 = vmatpush2.msra.mxu0 0.0
  %1809 = vmatprep.subr.mxu0 0.0
  %1810 = vmatpush2.msra.mxu0 0.0
  %1811 = vmatprep.subr.mxu0 0.0
  %1812 = vmatpush2.msra.mxu0 0.0
  %1813 = vmatprep.subr.mxu0 0.0
  %1814 = vmatpush2.msra.mxu0 0.0
  %1815 = vmatprep.subr.mxu0 0.0
  %1816 = vmatpush2.msra.mxu0 0.0
  %1817 = vmatprep.subr.mxu0 0.0
  %1818 = vmatpush2.msra.mxu0 0.0
  %1819 = vmatprep.subr.mxu0 0.0
  %1820 = vmatpush2.msra.mxu0 0.0
  %1821 = vmatprep.subr.mxu0 0.0
  %1822 = vmatpush2.msra.mxu0 0.0
  %1823 = vmatprep.subr.mxu0 0.0
  %1824 = vmatpush2.msra.mxu0 0.0
  %1825 = vmatprep.subr.mxu0 0.0
  %1826 = vmatpush2.msra.mxu0 0.0
  %1827 = vmatprep.subr.mxu0 0.0
  %1828 = vmatpush2.msra.mxu0 0.0
  %1829 = vmatprep.subr.mxu0 0.0
  %1830 = vmatpush2.msra.mxu0 0.0
  %1831 = vmatprep.subr.mxu0 0.0
  %1832 = vmatpush2.msra.mxu0 0.0
  %1833 = vmatprep.subr.mxu0 0.0
  %1834 = vmatpush2.msra.mxu0 0.0
  %1835 = vmatprep.mubr.f32.mxu0 0.0
  %1836 = vmatmul.mubr.f32.gmra.mxu0 %v1766
  %v1837 = vpop.f32.mrf.mxu0
  %v1838 = vadd.f32 0.0, %v1837
  %v1839 = vpop.f32.mrf.mxu0
  %1840 = vmatprep.mubr.f32.mxu0 0.0
  %1841 = vmatmul.mubr.f32.gmra.mxu0 %v1769
  %v1842 = vpop.f32.mrf.mxu0
  %v1843 = vadd.f32 0.0, %v1842
  %v1844 = vpop.f32.mrf.mxu0
  %1845 = vdwg.mxu0
  %1848 = vrot.lane.b32.xlu0 %v1838, 8
  %v1849 = vpop.permute.xlu0 %1848
  %1850 = vrot.lane.b32.xlu0 %v1843, 8
  %v1851 = vpop.permute.xlu0 %1850
  %v1854 = vsel %vm532, %v1709, %v1849
  %v1855 = vsel %vm532, %v1714, %v1851
  %s1856 = scalar_lea.vmem %s10, 1
  %v1857 = vld [vmem:[%s1856] sm:$0x1]
  %v1859 = vlaneseq
  %v1860 = vshrl.u32 %v1859, 7
  %v1861 = vsub.s32 0, %v1860
  %v1862 = vrot.slane %v1857, %v1861
  %v1864 = vadd.f32 %v1854, %v1862
  %v1865 = vadd.f32 %v1855, %v1862
  %vm1866 = vcmp.gt.f32.partialorder %v1864, 0.0
  %vm1867 = vcmp.gt.f32.partialorder %v1865, 0.0
  %v1868 = vmin.f32 %v1864, 0.0
  %v1869 = vmin.f32 %v1865, 0.0
  %v1870 = vmul.f32 %v1868, 1.442695
  %v1871 = vpow.pop %v1870
  %v1872 = vmul.f32 %v1869, 1.442695
  %v1873 = vpow.pop %v1872
  %v1874 = vsub.f32 %v1871, 1.0
  %v1875 = vsub.f32 %v1873, 1.0
  %v1876 = vsel %vm1866, %v1864, %v1874
  %v1877 = vsel %vm1867, %v1865, %v1875
  %v1878 = vld [vmem:[%s11] sm:$0xff]
  %v1879 = vld [vmem:[%s11 + $0x8] sm:$0xff]
  %v1880 = vld [vmem:[%s12] sm:$0x1]
  %v1882 = vlaneseq
  %v1883 = vshrl.u32 %v1882, 7
  %v1884 = vsub.s32 0, %v1883
  %v1885 = vrot.slane %v1880, %v1884
  %v1888 = vsel %vm70, %v1586, 0
  %v1891 = vsel %vm70, %v1587, 0
  %v1894 = vsel %vm70, %v1876, 0
  %v1897 = vsel %vm70, %v1877, 0
  %1899 = vmatprep.subr.mxu0 0.0
  %1900 = vmatpush1.msra.mxu0 0.0
  %1901 = vmatprep.subr.mxu0 0.0
  %1902 = vmatpush1.msra.mxu0 0.0
  %1903 = vmatprep.subr.mxu0 0.0
  %1904 = vmatpush1.msra.mxu0 0.0
  %1905 = vmatprep.subr.mxu0 0.0
  %1906 = vmatpush1.msra.mxu0 0.0
  %1907 = vmatprep.subr.mxu0 0.0
  %1908 = vmatpush1.msra.mxu0 0.0
  %1909 = vmatprep.subr.mxu0 0.0
  %1910 = vmatpush1.msra.mxu0 0.0
  %1911 = vmatprep.subr.mxu0 0.0
  %1912 = vmatpush1.msra.mxu0 0.0
  %1913 = vmatprep.subr.mxu0 0.0
  %1914 = vmatpush1.msra.mxu0 0.0
  %1915 = vmatprep.subr.mxu0 0.0
  %1916 = vmatpush1.msra.mxu0 0.0
  %1917 = vmatprep.subr.mxu0 0.0
  %1918 = vmatpush1.msra.mxu0 0.0
  %1919 = vmatprep.subr.mxu0 0.0
  %1920 = vmatpush1.msra.mxu0 0.0
  %1921 = vmatprep.subr.mxu0 0.0
  %1922 = vmatpush1.msra.mxu0 0.0
  %1923 = vmatprep.subr.mxu0 0.0
  %1924 = vmatpush1.msra.mxu0 0.0
  %1925 = vmatprep.subr.mxu0 0.0
  %1926 = vmatpush1.msra.mxu0 0.0
  %1927 = vmatprep.subr.mxu0 0.0
  %1928 = vmatpush1.msra.mxu0 %v1879
  %1929 = vmatprep.subr.mxu0 0.0
  %1930 = vmatpush1.msra.mxu0 %v1878
  %1931 = vmatprep.subr.mxu0 0.0
  %1932 = vmatpush2.msra.mxu0 0.0
  %1933 = vmatprep.subr.mxu0 0.0
  %1934 = vmatpush2.msra.mxu0 0.0
  %1935 = vmatprep.subr.mxu0 0.0
  %1936 = vmatpush2.msra.mxu0 0.0
  %1937 = vmatprep.subr.mxu0 0.0
  %1938 = vmatpush2.msra.mxu0 0.0
  %1939 = vmatprep.subr.mxu0 0.0
  %1940 = vmatpush2.msra.mxu0 0.0
  %1941 = vmatprep.subr.mxu0 0.0
  %1942 = vmatpush2.msra.mxu0 0.0
  %1943 = vmatprep.subr.mxu0 0.0
  %1944 = vmatpush2.msra.mxu0 0.0
  %1945 = vmatprep.subr.mxu0 0.0
  %1946 = vmatpush2.msra.mxu0 0.0
  %1947 = vmatprep.subr.mxu0 0.0
  %1948 = vmatpush2.msra.mxu0 0.0
  %1949 = vmatprep.subr.mxu0 0.0
  %1950 = vmatpush2.msra.mxu0 0.0
  %1951 = vmatprep.subr.mxu0 0.0
  %1952 = vmatpush2.msra.mxu0 0.0
  %1953 = vmatprep.subr.mxu0 0.0
  %1954 = vmatpush2.msra.mxu0 0.0
  %1955 = vmatprep.subr.mxu0 0.0
  %1956 = vmatpush2.msra.mxu0 0.0
  %1957 = vmatprep.subr.mxu0 0.0
  %1958 = vmatpush2.msra.mxu0 0.0
  %1959 = vmatprep.subr.mxu0 0.0
  %1960 = vmatpush2.msra.mxu0 0.0
  %1961 = vmatprep.subr.mxu0 0.0
  %1962 = vmatpush2.msra.mxu0 0.0
  %1963 = vmatprep.mubr.f32.mxu0 0.0
  %1964 = vmatmul.mubr.f32.gmra.mxu0 %v1888
  %v1965 = vpop.f32.mrf.mxu0
  %v1966 = vadd.f32 %v1885, %v1965
  %v1967 = vpop.f32.mrf.mxu0
  %1968 = vmatprep.mubr.f32.mxu0 0.0
  %1969 = vmatmul.mubr.f32.gmra.mxu0 %v1891
  %v1970 = vpop.f32.mrf.mxu0
  %v1971 = vadd.f32 %v1885, %v1970
  %v1972 = vpop.f32.mrf.mxu0
  %1973 = vmatprep.mubr.f32.mxu0 0.0
  %1974 = vmatmul.mubr.f32.gmra.mxu0 %v1894
  %v1975 = vpop.f32.mrf.mxu0
  %v1976 = vadd.f32 %v1885, %v1975
  %v1977 = vpop.f32.mrf.mxu0
  %1978 = vmatprep.mubr.f32.mxu0 0.0
  %1979 = vmatmul.mubr.f32.gmra.mxu0 %v1897
  %v1980 = vpop.f32.mrf.mxu0
  %v1981 = vadd.f32 %v1885, %v1980
  %v1982 = vpop.f32.mrf.mxu0
  %1983 = vdwg.mxu0
  %v1984 = vtanh.pop %v1966
  %v1985 = vtanh.pop %v1971
  %v1986 = vtanh.pop %v1976
  %v1987 = vtanh.pop %v1981
  %v1988 = vld [vmem:[%s13] sm:$0xff]
  %v1989 = vld [vmem:[%s13 + $0x8] sm:$0xff]
  %v1990 = vld [vmem:[%s13 + $0x10] sm:$0xff]
  %v1991 = vld [vmem:[%s13 + $0x18] sm:$0xff]
  %v1992 = vld [vmem:[%s13 + $0x20] sm:$0xff]
  %v1993 = vld [vmem:[%s13 + $0x28] sm:$0xff]
  %v1994 = vld [vmem:[%s13 + $0x30] sm:$0xff]
  %v1995 = vld [vmem:[%s13 + $0x38] sm:$0xff]
  %v1996 = vld [vmem:[%s13 + $0x40] sm:$0xff]
  %v1997 = vld [vmem:[%s13 + $0x48] sm:$0xff]
  %v1998 = vld [vmem:[%s13 + $0x50] sm:$0xff]
  %v1999 = vld [vmem:[%s13 + $0x58] sm:$0xff]
  %v2000 = vld [vmem:[%s13 + $0x60] sm:$0xff]
  %v2001 = vld [vmem:[%s13 + $0x68] sm:$0xff]
  %v2002 = vld [vmem:[%s13 + $0x70] sm:$0xff]
  %v2003 = vld [vmem:[%s13 + $0x78] sm:$0xff]
  %2004 = vmatprep.subr.mxu0 0.0
  %2005 = vmatpush1.msra.mxu0 %v2003
  %2006 = vmatprep.subr.mxu0 0.0
  %2007 = vmatpush1.msra.mxu0 %v2002
  %2008 = vmatprep.subr.mxu0 0.0
  %2009 = vmatpush1.msra.mxu0 %v2001
  %2010 = vmatprep.subr.mxu0 0.0
  %2011 = vmatpush1.msra.mxu0 %v2000
  %2012 = vmatprep.subr.mxu0 0.0
  %2013 = vmatpush1.msra.mxu0 %v1999
  %2014 = vmatprep.subr.mxu0 0.0
  %2015 = vmatpush1.msra.mxu0 %v1998
  %2016 = vmatprep.subr.mxu0 0.0
  %2017 = vmatpush1.msra.mxu0 %v1997
  %2018 = vmatprep.subr.mxu0 0.0
  %2019 = vmatpush1.msra.mxu0 %v1996
  %2020 = vmatprep.subr.mxu0 0.0
  %2021 = vmatpush1.msra.mxu0 %v1995
  %2022 = vmatprep.subr.mxu0 0.0
  %2023 = vmatpush1.msra.mxu0 %v1994
  %2024 = vmatprep.subr.mxu0 0.0
  %2025 = vmatpush1.msra.mxu0 %v1993
  %2026 = vmatprep.subr.mxu0 0.0
  %2027 = vmatpush1.msra.mxu0 %v1992
  %2028 = vmatprep.subr.mxu0 0.0
  %2029 = vmatpush1.msra.mxu0 %v1991
  %2030 = vmatprep.subr.mxu0 0.0
  %2031 = vmatpush1.msra.mxu0 %v1990
  %2032 = vmatprep.subr.mxu0 0.0
  %2033 = vmatpush1.msra.mxu0 %v1989
  %2034 = vmatprep.subr.mxu0 0.0
  %2035 = vmatpush1.msra.mxu0 %v1988
  %2036 = vmatprep.subr.mxu0 0.0
  %2037 = vmatpush2.msra.mxu0 0.0
  %2038 = vmatprep.subr.mxu0 0.0
  %2039 = vmatpush2.msra.mxu0 0.0
  %2040 = vmatprep.subr.mxu0 0.0
  %2041 = vmatpush2.msra.mxu0 0.0
  %2042 = vmatprep.subr.mxu0 0.0
  %2043 = vmatpush2.msra.mxu0 0.0
  %2044 = vmatprep.subr.mxu0 0.0
  %2045 = vmatpush2.msra.mxu0 0.0
  %2046 = vmatprep.subr.mxu0 0.0
  %2047 = vmatpush2.msra.mxu0 0.0
  %2048 = vmatprep.subr.mxu0 0.0
  %2049 = vmatpush2.msra.mxu0 0.0
  %2050 = vmatprep.subr.mxu0 0.0
  %2051 = vmatpush2.msra.mxu0 0.0
  %2052 = vmatprep.subr.mxu0 0.0
  %2053 = vmatpush2.msra.mxu0 0.0
  %2054 = vmatprep.subr.mxu0 0.0
  %2055 = vmatpush2.msra.mxu0 0.0
  %2056 = vmatprep.subr.mxu0 0.0
  %2057 = vmatpush2.msra.mxu0 0.0
  %2058 = vmatprep.subr.mxu0 0.0
  %2059 = vmatpush2.msra.mxu0 0.0
  %2060 = vmatprep.subr.mxu0 0.0
  %2061 = vmatpush2.msra.mxu0 0.0
  %2062 = vmatprep.subr.mxu0 0.0
  %2063 = vmatpush2.msra.mxu0 0.0
  %2064 = vmatprep.subr.mxu0 0.0
  %2065 = vmatpush2.msra.mxu0 0.0
  %2066 = vmatprep.subr.mxu0 0.0
  %2067 = vmatpush2.msra.mxu0 0.0
  %2068 = vmatprep.mubr.f32.mxu0 0.0
  %2069 = vmatmul.mubr.f32.gmra.mxu0 %v1984
  %v2070 = vpop.f32.mrf.mxu0
  %v2071 = vadd.f32 0.0, %v2070
  %v2072 = vpop.f32.mrf.mxu0
  %2073 = vmatprep.mubr.f32.mxu0 0.0
  %2074 = vmatmul.mubr.f32.gmra.mxu0 %v1985
  %v2075 = vpop.f32.mrf.mxu0
  %v2076 = vadd.f32 0.0, %v2075
  %v2077 = vpop.f32.mrf.mxu0
  %2078 = vmatprep.mubr.f32.mxu0 0.0
  %2079 = vmatmul.mubr.f32.gmra.mxu0 %v1986
  %v2080 = vpop.f32.mrf.mxu0
  %v2081 = vadd.f32 0.0, %v2080
  %v2082 = vpop.f32.mrf.mxu0
  %2083 = vmatprep.mubr.f32.mxu0 0.0
  %2084 = vmatmul.mubr.f32.gmra.mxu0 %v1987
  %v2085 = vpop.f32.mrf.mxu0
  %v2086 = vadd.f32 0.0, %v2085
  %v2087 = vpop.f32.mrf.mxu0
  %2088 = vdwg.mxu0
  %v2089 = vsel %vm1057, %v2071, 0.0
  %v2090 = vsel %vm1057, %v2076, 0.0
  %v2091 = vadd.f32 %v2089, %v2090
  %2092 = vadd.xlane.f32.xlu0 %v2091
  %v2093 = vpop.xlane.xlu0 %2092
  %v2094 = vrot.slane %v2093, 4
  %v2095 = vadd.f32 %v2093, %v2094
  %v2096 = vrot.slane %v2095, 2
  %v2097 = vadd.f32 %v2095, %v2096
  %v2098 = vrot.slane %v2097, 1
  %v2099 = vadd.f32 %v2097, %v2098
  %s2100 = vtos %v2099
  %v2101 = vstv %s2100
  %v2102 = vmul.f32 %v2101, 0.0625
  %v2103 = vsel %vm1057, %v2081, 0.0
  %v2104 = vsel %vm1057, %v2086, 0.0
  %v2105 = vadd.f32 %v2103, %v2104
  %2106 = vadd.xlane.f32.xlu0 %v2105
  %v2107 = vpop.xlane.xlu0 %2106
  %v2108 = vrot.slane %v2107, 4
  %v2109 = vadd.f32 %v2107, %v2108
  %v2110 = vrot.slane %v2109, 2
  %v2111 = vadd.f32 %v2109, %v2110
  %v2112 = vrot.slane %v2111, 1
  %v2113 = vadd.f32 %v2111, %v2112
  %s2114 = vtos %v2113
  %v2115 = vstv %s2114
  %v2116 = vmul.f32 %v2115, 0.0625
  %v2117 = vmax.f32 %v2102, %v2116
  %v2118 = vsub.f32 %v2102, %v2117
  %v2119 = vmul.f32 %v2118, 1.442695
  %v2120 = vpow.pop %v2119
  %v2121 = vsub.f32 %v2116, %v2117
  %v2122 = vmul.f32 %v2121, 1.442695
  %v2123 = vpow.pop %v2122
  %v2124 = vadd.f32 %v2120, %v2123
  %v2125 = vrcp.pop %v2124
  %v2126 = vmul.f32 %v2120, %v2125
  %v2127 = vmul.f32 %v2123, %v2125
  %v2128 = vmul.f32 %v2126, %v1586
  %v2129 = vmul.f32 %v2126, %v1587
  %v2130 = vmul.f32 %v2127, %v1876
  %v2131 = vmul.f32 %v2127, %v1877
  %v2132 = vadd.f32 %v2128, %v2130
  %v2133 = vadd.f32 %v2129, %v2131
  %v2134 = vld [vmem:[%s14] sm:$0xff]
  %v2135 = vld [vmem:[%s14 + $0x8] sm:$0xff]
  %v2136 = vld [vmem:[%s15] sm:$0x1]
  %v2138 = vlaneseq
  %v2139 = vshrl.u32 %v2138, 7
  %v2140 = vsub.s32 0, %v2139
  %v2141 = vrot.slane %v2136, %v2140
  %v2144 = vsel %vm70, %v2132, 0
  %v2147 = vsel %vm70, %v2133, 0
  %2149 = vmatprep.subr.mxu0 0.0
  %2150 = vmatpush1.msra.mxu0 0.0
  %2151 = vmatprep.subr.mxu0 0.0
  %2152 = vmatpush1.msra.mxu0 0.0
  %2153 = vmatprep.subr.mxu0 0.0
  %2154 = vmatpush1.msra.mxu0 0.0
  %2155 = vmatprep.subr.mxu0 0.0
  %2156 = vmatpush1.msra.mxu0 0.0
  %2157 = vmatprep.subr.mxu0 0.0
  %2158 = vmatpush1.msra.mxu0 0.0
  %2159 = vmatprep.subr.mxu0 0.0
  %2160 = vmatpush1.msra.mxu0 0.0
  %2161 = vmatprep.subr.mxu0 0.0
  %2162 = vmatpush1.msra.mxu0 0.0
  %2163 = vmatprep.subr.mxu0 0.0
  %2164 = vmatpush1.msra.mxu0 0.0
  %2165 = vmatprep.subr.mxu0 0.0
  %2166 = vmatpush1.msra.mxu0 0.0
  %2167 = vmatprep.subr.mxu0 0.0
  %2168 = vmatpush1.msra.mxu0 0.0
  %2169 = vmatprep.subr.mxu0 0.0
  %2170 = vmatpush1.msra.mxu0 0.0
  %2171 = vmatprep.subr.mxu0 0.0
  %2172 = vmatpush1.msra.mxu0 0.0
  %2173 = vmatprep.subr.mxu0 0.0
  %2174 = vmatpush1.msra.mxu0 0.0
  %2175 = vmatprep.subr.mxu0 0.0
  %2176 = vmatpush1.msra.mxu0 0.0
  %2177 = vmatprep.subr.mxu0 0.0
  %2178 = vmatpush1.msra.mxu0 %v2135
  %2179 = vmatprep.subr.mxu0 0.0
  %2180 = vmatpush1.msra.mxu0 %v2134
  %2181 = vmatprep.subr.mxu0 0.0
  %2182 = vmatpush2.msra.mxu0 0.0
  %2183 = vmatprep.subr.mxu0 0.0
  %2184 = vmatpush2.msra.mxu0 0.0
  %2185 = vmatprep.subr.mxu0 0.0
  %2186 = vmatpush2.msra.mxu0 0.0
  %2187 = vmatprep.subr.mxu0 0.0
  %2188 = vmatpush2.msra.mxu0 0.0
  %2189 = vmatprep.subr.mxu0 0.0
  %2190 = vmatpush2.msra.mxu0 0.0
  %2191 = vmatprep.subr.mxu0 0.0
  %2192 = vmatpush2.msra.mxu0 0.0
  %2193 = vmatprep.subr.mxu0 0.0
  %2194 = vmatpush2.msra.mxu0 0.0
  %2195 = vmatprep.subr.mxu0 0.0
  %2196 = vmatpush2.msra.mxu0 0.0
  %2197 = vmatprep.subr.mxu0 0.0
  %2198 = vmatpush2.msra.mxu0 0.0
  %2199 = vmatprep.subr.mxu0 0.0
  %2200 = vmatpush2.msra.mxu0 0.0
  %2201 = vmatprep.subr.mxu0 0.0
  %2202 = vmatpush2.msra.mxu0 0.0
  %2203 = vmatprep.subr.mxu0 0.0
  %2204 = vmatpush2.msra.mxu0 0.0
  %2205 = vmatprep.subr.mxu0 0.0
  %2206 = vmatpush2.msra.mxu0 0.0
  %2207 = vmatprep.subr.mxu0 0.0
  %2208 = vmatpush2.msra.mxu0 0.0
  %2209 = vmatprep.subr.mxu0 0.0
  %2210 = vmatpush2.msra.mxu0 0.0
  %2211 = vmatprep.subr.mxu0 0.0
  %2212 = vmatpush2.msra.mxu0 0.0
  %2213 = vmatprep.mubr.f32.mxu0 0.0
  %2214 = vmatmul.mubr.f32.gmra.mxu0 %v2144
  %v2215 = vpop.f32.mrf.mxu0
  %v2216 = vadd.f32 %v2141, %v2215
  %v2217 = vpop.f32.mrf.mxu0
  %2218 = vmatprep.mubr.f32.mxu0 0.0
  %2219 = vmatmul.mubr.f32.gmra.mxu0 %v2147
  %v2220 = vpop.f32.mrf.mxu0
  %v2221 = vadd.f32 %v2141, %v2220
  %v2222 = vpop.f32.mrf.mxu0
  %2223 = vdwg.mxu0
  %vm2224 = vcmask 31744
  %2225 = vst.msk [vmem:[%s16] sm:$0xff] %vm2224, %v2216
  %2226 = vst.msk [vmem:[%s16 + $0x8] sm:$0xff] %vm2224, %v2221
  // Predicated region
  $region66: #{tpu_custom_call.1} parent=0 // pred_check
    _
  $region67: #{tpu_custom_call.1} parent=0 // pred_check_branch
    %2228 = sbr.rel (0) target = $region69
  $region68: #{tpu_custom_call.1} parent=0 // pred_region
    _
  $region69: #{tpu_custom_call.1} parent=0 // pred_fallthru
    _
  // Predicated region
  $region70: #{tpu_custom_call.1} parent=0 // pred_check
    _
  $region71: #{tpu_custom_call.1} parent=0 // pred_check_branch
    %2230 = sbr.rel (0) target = $region73
  $region72: #{tpu_custom_call.1} parent=0 // pred_region
    _
  $region73: #{tpu_custom_call.1} parent=0 // pred_fallthru
    _

</llo_original>
